<compile_context>
chip_gen: v6e
topology: v6e:2x2x1
jax: 0.10.0
libtpu: 0.0.40
codegen_flags: <defaults>
</compile_context>

<pallas_src>
import numpy as np
import jax
import jax.numpy as jnp
from jax.experimental import pallas as pl
from jax.experimental.pallas import tpu as pltpu


BATCH_TILE = 512          # rows per grid step once the batch is large
IN_FEATS = 14 * 14        # 196 live input pixels, lane-padded to 256


def _round_up(a, b):
    return (a + b - 1) // b * b


# ----------------------------- Pallas kernel -------------------------------

def _net_fused_kernel(x_ref, w1_ref, b1_ref, w2_ref, b2_ref,
                      wfc_ref, bfc_ref, o_ref):
    x = x_ref[...]                                                    # (TB, 256) bf16

    # conv1 as one bf16 MXU matmul onto the pool-phase layout (bias/ReLU deferred).
    h1 = jnp.dot(x, w1_ref[...], preferred_element_type=jnp.float32)  # (TB, 2048) f32

    # MaxPool2d(2,2): elementwise max across the four 512-lane phase groups.
    # Bias add + ReLU commute past the max (bias repeats per phase, ReLU monotone).
    pooled = jnp.maximum(jnp.maximum(h1[:, 0:512], h1[:, 512:1024]),
                         jnp.maximum(h1[:, 1024:1536], h1[:, 1536:2048]))
    pooled = jnp.maximum(pooled + b1_ref[...], 0.0)                   # (TB, 512)

    # conv2 + bias + ReLU; output columns are already in NCHW flatten order.
    h2 = jnp.dot(pooled.astype(jnp.bfloat16), w2_ref[...],
                 preferred_element_type=jnp.float32)
    h2 = jnp.maximum(h2 + b2_ref[...], 0.0)                           # (TB, 256)

    # TODO(synk): dropout1(p=0.25) uses inference semantics (identity); no RNG mask.

    # fc2(fc1(.)) folded offline into a single (256, 128) matrix + bias.
    out = jnp.dot(h2.astype(jnp.bfloat16), wfc_ref[...],
                  preferred_element_type=jnp.float32) + bfc_ref[...]
    o_ref[...] = out.astype(o_ref.dtype)                              # (TB, 128)


def _fused_call(xp, packed, tb):
    n_pad = xp.shape[0]
    w1, b1, w2, b2, wfc, bfc = packed

    def const(shape):
        return pl.BlockSpec(shape, lambda i: (0, 0))

    return pl.pallas_call(
        _net_fused_kernel,
        out_shape=jax.ShapeDtypeStruct((n_pad, 128), jnp.float32),
        grid=(n_pad // tb,),
        in_specs=[
            pl.BlockSpec((tb, 256), lambda i: (i, 0)),   # x tile (bf16)
            const((256, 2048)), const((1, 512)),         # conv1 dense (bf16) + pooled bias
            const((512, 256)), const((1, 256)),          # conv2 dense (bf16) + bias
            const((256, 128)), const((1, 128)),          # folded fc1@fc2 (bf16) + bias
        ],
        out_specs=pl.BlockSpec((tb, 128), lambda i: (i, 0)),
        compiler_params=pltpu.CompilerParams(
            dimension_semantics=("parallel",),
            vmem_limit_bytes=32 * 1024 * 1024),
    )(xp, w1, b1, w2, b2, wfc, bfc)


# ---------------------- one-time weight preprocessing -----------------------

def pack_params(params):
    """Repack torch-layout weights into lane-dense bf16 matrices (host, once)."""
    c1w = np.asarray(params["conv1_w"], dtype=np.float32)   # (30, 1, 3, 3)
    c1b = np.asarray(params["conv1_b"], dtype=np.float32)   # (30,)
    c2w = np.asarray(params["conv2_w"], dtype=np.float32)   # (60, 30, 3, 3)
    c2b = np.asarray(params["conv2_b"], dtype=np.float32)   # (60,)
    f1w = np.asarray(params["fc1_w"], dtype=np.float32)     # (140, 240)
    f1b = np.asarray(params["fc1_b"], dtype=np.float32)     # (140,)
    f2w = np.asarray(params["fc2_w"], dtype=np.float32)     # (14, 140)
    f2b = np.asarray(params["fc2_b"], dtype=np.float32)     # (14,)

    # conv1 (stride 2, pad 2, 14x14 -> 8x8x30) as a (256, 2048) dense matrix.
    # Rows: 196 live flattened pixels + 60 zero rows (input lane padding).
    # Cols: 4 groups of 512 by pool-phase (dy,dx); within a group the order is
    #       (pool_y, pool_x, out_channel) = 480 live cols + 32 zero cols.
    W1 = np.zeros((256, 2048), np.float32)
    for dy in range(2):
        for dx in range(2):
            g = 2 * dy + dx
            for py in range(4):
                for px in range(4):
                    oy, ox = 2 * py + dy, 2 * px + dx
                    col = g * 512 + (py * 4 + px) * 30
                    for ki in range(3):
                        iy = 2 * oy + ki - 2
                        if not 0 <= iy < 14:
                            continue
                        for kj in range(3):
                            ix = 2 * ox + kj - 2
                            if not 0 <= ix < 14:
                                continue
                            W1[iy * 14 + ix, col:col + 30] = c1w[:, 0, ki, kj]

    # conv1 bias in pooled layout (pool_y, pool_x, channel): applied AFTER the
    # 4-way pool max (bias repeats across phases; ReLU is monotone -> exact).
    B1 = np.zeros((1, 512), np.float32)
    for p in range(16):
        B1[0, p * 30:(p + 1) * 30] = c1b

    # conv2 (3x3, valid, 30x4x4 -> 60x2x2) as a (512, 256) dense matrix.
    # Rows: pooled layout (pool_y, pool_x, channel) = 480 live + 32 zero rows.
    # Cols: PyTorch NCHW flatten order (c_out, oy, ox) = 240 live + 16 zero.
    W2 = np.zeros((512, 256), np.float32)
    B2 = np.zeros((1, 256), np.float32)
    for co in range(60):
        for oy in range(2):
            for ox in range(2):
                col = co * 4 + oy * 2 + ox
                B2[0, col] = c2b[co]
                for ki in range(3):
                    for kj in range(3):
                        row = ((oy + ki) * 4 + (ox + kj)) * 30
                        W2[row:row + 30, col] = c2w[co, :, ki, kj]

    # fc2(fc1(.)) folded into a single matrix + bias (no nonlinearity between).
    WFC = np.zeros((256, 128), np.float32)
    WFC[:240, :14] = f1w.T @ f2w.T                       # (240, 14)
    BFC = np.zeros((1, 128), np.float32)
    BFC[0, :14] = f1b @ f2w.T + f2b

    def bf16(a):
        return jnp.asarray(a, dtype=jnp.bfloat16)

    def f32(a):
        return jnp.asarray(a, dtype=jnp.float32)

    return (bf16(W1), f32(B1), bf16(W2), f32(B2), bf16(WFC), f32(BFC))


# ------------------------------ forward pass --------------------------------

@jax.jit
def net_forward(x_nchw, packed):
    """x_nchw: (N, 1, 14, 14) float; returns (N, 14)."""
    n = x_nchw.shape[0]
    assert x_nchw.shape[1:] == (1, 14, 14), x_nchw.shape

    xf = x_nchw.reshape(n, IN_FEATS).astype(jnp.bfloat16)

    # Batch-tile selection: single tile for small batches; >=2 grid steps once
    # n > 128 (keeps both v7x TensorCores busy); cap at BATCH_TILE.
    n8 = _round_up(n, 8)
    if n8 <= 128:
        tb = n8
    else:
        tb = min(BATCH_TILE, _round_up((n8 + 1) // 2, 8))
    n_pad = _round_up(n, tb)

    xf = jnp.pad(xf, ((0, n_pad - n), (0, 256 - IN_FEATS)))   # batch + lane padding

    out = _fused_call(xf, packed, tb)                          # (n_pad, 128) f32
    return out[:n, :14]


# ----------------------- pure-JAX reference (test only) ---------------------

def net_reference(x, params):
    y = jax.lax.conv_general_dilated(
        x, params["conv1_w"], window_strides=(2, 2), padding=((2, 2), (2, 2)),
        dimension_numbers=("NCHW", "OIHW", "NCHW"))
    y = jnp.maximum(y + params["conv1_b"][None, :, None, None], 0.0)
    y = jax.lax.reduce_window(y, -jnp.inf, jax.lax.max,
                              (1, 1, 2, 2), (1, 1, 2, 2), "VALID")
    y = jax.lax.conv_general_dilated(
        y, params["conv2_w"], window_strides=(1, 1), padding="VALID",
        dimension_numbers=("NCHW", "OIHW", "NCHW"))
    y = jnp.maximum(y + params["conv2_b"][None, :, None, None], 0.0)
    y = y.reshape(y.shape[0], -1)
    y = y @ params["fc1_w"].T + params["fc1_b"]
    y = y @ params["fc2_w"].T + params["fc2_b"]
    return y


def init_params(key):
    ks = jax.random.split(key, 8)

    def rnd(k, shape, scale=0.05):
        return scale * jax.random.normal(k, shape, dtype=jnp.float32)

    return {
        "conv1_w": rnd(ks[0], (30, 1, 3, 3)),
        "conv1_b": rnd(ks[1], (30,)),
        "conv2_w": rnd(ks[2], (60, 30, 3, 3)),
        "conv2_b": rnd(ks[3], (60,)),
        "fc1_w":   rnd(ks[4], (140, 240)),
        "fc1_b":   rnd(ks[5], (140,)),
        "fc2_w":   rnd(ks[6], (14, 140)),
        "fc2_b":   rnd(ks[7], (14,)),
    }


if __name__ == "__main__":
    key = jax.random.PRNGKey(0)
    pkey, xkey = jax.random.split(key)
    params = init_params(pkey)
    packed = pack_params(params)          # one-time weight repack (hoisted)

    # Input spatial size 14x14 makes the flatten land exactly on 60*2*2=240.
    x = jax.random.normal(xkey, (2, 1, 14, 14), dtype=jnp.float32)

    out = jax.block_until_ready(net_forward(x, packed))
    assert out.shape == (2, 14), out.shape

    ref = jax.block_until_ready(net_reference(x, params))
    max_err = float(jnp.max(jnp.abs(out - ref)))
    assert jnp.allclose(out, ref, atol=2e-2, rtol=2e-2), max_err

    print("KERNEL_OK")
</pallas_src>

<mosaic_0001>
module attributes {stable_mosaic.version = 11 : i64} {
  func.func @_net_fused_kernel(%arg0: i32, %arg1: memref<8x256xbf16, #tpu.memory_space<vmem>>, %arg2: memref<256x2048xbf16, #tpu.memory_space<vmem>>, %arg3: memref<1x512xf32, #tpu.memory_space<vmem>>, %arg4: memref<512x256xbf16, #tpu.memory_space<vmem>>, %arg5: memref<1x256xf32, #tpu.memory_space<vmem>>, %arg6: memref<256x128xbf16, #tpu.memory_space<vmem>>, %arg7: memref<1x128xf32, #tpu.memory_space<vmem>>, %arg8: memref<8x128xf32, #tpu.memory_space<vmem>>) attributes {dimension_semantics = [#tpu.dimension_semantics<parallel>], iteration_bounds = array<i64: 1>, scalar_prefetch = 0 : i64, scratch_operands = 0 : i64, tpu.core_type = #tpu.core_type<tc>, window_params = [{transform_indices = @transform_0, window_bounds = array<i64: 8, 256>}, {pipeline_mode = #tpu.pipeline_mode<synchronous>, transform_indices = @transform_1, window_bounds = array<i64: 256, 2048>}, {pipeline_mode = #tpu.pipeline_mode<synchronous>, transform_indices = @transform_2, window_bounds = array<i64: 1, 512>}, {pipeline_mode = #tpu.pipeline_mode<synchronous>, transform_indices = @transform_3, window_bounds = array<i64: 512, 256>}, {pipeline_mode = #tpu.pipeline_mode<synchronous>, transform_indices = @transform_4, window_bounds = array<i64: 1, 256>}, {pipeline_mode = #tpu.pipeline_mode<synchronous>, transform_indices = @transform_5, window_bounds = array<i64: 256, 128>}, {pipeline_mode = #tpu.pipeline_mode<synchronous>, transform_indices = @transform_6, window_bounds = array<i64: 1, 128>}, {transform_indices = @transform_7, window_bounds = array<i64: 8, 128>}]} {
    %c0 = arith.constant 0 : index
    %c0_0 = arith.constant 0 : index
    %0 = vector.load %arg1[%c0, %c0_0] : memref<8x256xbf16, #tpu.memory_space<vmem>>, vector<8x256xbf16>
    %c0_1 = arith.constant 0 : index
    %c0_2 = arith.constant 0 : index
    %1 = vector.load %arg2[%c0_1, %c0_2] : memref<256x2048xbf16, #tpu.memory_space<vmem>>, vector<256x2048xbf16>
    %cst = arith.constant dense<0.000000e+00> : vector<8x2048xf32>
    %2 = tpu.matmul %0, %1, %cst {dimension_numbers = #tpu.dot_dimension_numbers<[1], [0], [0], [1], [0, 0, 1, 1], [], []>} : vector<8x256xbf16>, vector<256x2048xbf16>, vector<8x2048xf32> -> vector<8x2048xf32>
    %3 = vector.extract_strided_slice %2 {offsets = [0, 0], sizes = [8, 512], strides = [1, 1]} : vector<8x2048xf32> to vector<8x512xf32>
    %4 = vector.extract_strided_slice %2 {offsets = [0, 512], sizes = [8, 512], strides = [1, 1]} : vector<8x2048xf32> to vector<8x512xf32>
    %5 = arith.maximumf %3, %4 : vector<8x512xf32>
    %6 = vector.extract_strided_slice %2 {offsets = [0, 1024], sizes = [8, 512], strides = [1, 1]} : vector<8x2048xf32> to vector<8x512xf32>
    %7 = vector.extract_strided_slice %2 {offsets = [0, 1536], sizes = [8, 512], strides = [1, 1]} : vector<8x2048xf32> to vector<8x512xf32>
    %8 = arith.maximumf %6, %7 : vector<8x512xf32>
    %9 = arith.maximumf %5, %8 : vector<8x512xf32>
    %c0_3 = arith.constant 0 : index
    %c0_4 = arith.constant 0 : index
    %10 = vector.load %arg3[%c0_3, %c0_4] : memref<1x512xf32, #tpu.memory_space<vmem>>, vector<1x512xf32>
    %11 = vector.broadcast %10 : vector<1x512xf32> to vector<8x512xf32>
    %12 = arith.addf %9, %11 : vector<8x512xf32>
    %cst_5 = arith.constant 0.000000e+00 : f32
    %13 = vector.broadcast %cst_5 : f32 to vector<8x512xf32>
    %14 = arith.maximumf %12, %13 : vector<8x512xf32>
    %15 = arith.truncf %14 : vector<8x512xf32> to vector<8x512xbf16>
    %c0_6 = arith.constant 0 : index
    %c0_7 = arith.constant 0 : index
    %16 = vector.load %arg4[%c0_6, %c0_7] : memref<512x256xbf16, #tpu.memory_space<vmem>>, vector<512x256xbf16>
    %cst_8 = arith.constant dense<0.000000e+00> : vector<8x256xf32>
    %17 = tpu.matmul %15, %16, %cst_8 {dimension_numbers = #tpu.dot_dimension_numbers<[1], [0], [0], [1], [0, 0, 1, 1], [], []>} : vector<8x512xbf16>, vector<512x256xbf16>, vector<8x256xf32> -> vector<8x256xf32>
    %c0_9 = arith.constant 0 : index
    %c0_10 = arith.constant 0 : index
    %18 = vector.load %arg5[%c0_9, %c0_10] : memref<1x256xf32, #tpu.memory_space<vmem>>, vector<1x256xf32>
    %19 = vector.broadcast %18 : vector<1x256xf32> to vector<8x256xf32>
    %20 = arith.addf %17, %19 : vector<8x256xf32>
    %cst_11 = arith.constant 0.000000e+00 : f32
    %21 = vector.broadcast %cst_11 : f32 to vector<8x256xf32>
    %22 = arith.maximumf %20, %21 : vector<8x256xf32>
    %23 = arith.truncf %22 : vector<8x256xf32> to vector<8x256xbf16>
    %c0_12 = arith.constant 0 : index
    %c0_13 = arith.constant 0 : index
    %24 = vector.load %arg6[%c0_12, %c0_13] : memref<256x128xbf16, #tpu.memory_space<vmem>>, vector<256x128xbf16>
    %cst_14 = arith.constant dense<0.000000e+00> : vector<8x128xf32>
    %25 = tpu.matmul %23, %24, %cst_14 {dimension_numbers = #tpu.dot_dimension_numbers<[1], [0], [0], [1], [0, 0, 1, 1], [], []>} : vector<8x256xbf16>, vector<256x128xbf16>, vector<8x128xf32> -> vector<8x128xf32>
    %c0_15 = arith.constant 0 : index
    %c0_16 = arith.constant 0 : index
    %26 = vector.load %arg7[%c0_15, %c0_16] : memref<1x128xf32, #tpu.memory_space<vmem>>, vector<1x128xf32>
    %27 = vector.broadcast %26 : vector<1x128xf32> to vector<8x128xf32>
    %28 = arith.addf %25, %27 : vector<8x128xf32>
    %c0_17 = arith.constant 0 : index
    %c0_18 = arith.constant 0 : index
    %29 = vector.load %arg8[%c0_17, %c0_18] : memref<8x128xf32, #tpu.memory_space<vmem>>, vector<8x128xf32>
    tpu.vector_store %arg8[%c0_17, %c0_18], %28 {strides = array<i32>} : memref<8x128xf32, #tpu.memory_space<vmem>>, vector<8x128xf32>,
    return
  }
  func.func @transform_0(%arg0: i32) -> (i32, i32) {
    %c0_i32 = arith.constant 0 : i32
    %c0_i32_0 = arith.constant 0 : i32
    return %arg0, %c0_i32 : i32, i32
  }
  func.func @transform_1(%arg0: i32) -> (i32, i32) {
    %c0_i32 = arith.constant 0 : i32
    %c0_i32_0 = arith.constant 0 : i32
    %c0_i32_1 = arith.constant 0 : i32
    return %c0_i32, %c0_i32_0 : i32, i32
  }
  func.func @transform_2(%arg0: i32) -> (i32, i32) {
    %c0_i32 = arith.constant 0 : i32
    %c0_i32_0 = arith.constant 0 : i32
    %c0_i32_1 = arith.constant 0 : i32
    return %c0_i32, %c0_i32_0 : i32, i32
  }
  func.func @transform_3(%arg0: i32) -> (i32, i32) {
    %c0_i32 = arith.constant 0 : i32
    %c0_i32_0 = arith.constant 0 : i32
    %c0_i32_1 = arith.constant 0 : i32
    return %c0_i32, %c0_i32_0 : i32, i32
  }
  func.func @transform_4(%arg0: i32) -> (i32, i32) {
    %c0_i32 = arith.constant 0 : i32
    %c0_i32_0 = arith.constant 0 : i32
    %c0_i32_1 = arith.constant 0 : i32
    return %c0_i32, %c0_i32_0 : i32, i32
  }
  func.func @transform_5(%arg0: i32) -> (i32, i32) {
    %c0_i32 = arith.constant 0 : i32
    %c0_i32_0 = arith.constant 0 : i32
    %c0_i32_1 = arith.constant 0 : i32
    return %c0_i32, %c0_i32_0 : i32, i32
  }
  func.func @transform_6(%arg0: i32) -> (i32, i32) {
    %c0_i32 = arith.constant 0 : i32
    %c0_i32_0 = arith.constant 0 : i32
    %c0_i32_1 = arith.constant 0 : i32
    return %c0_i32, %c0_i32_0 : i32, i32
  }
  func.func @transform_7(%arg0: i32) -> (i32, i32) {
    %c0_i32 = arith.constant 0 : i32
    %c0_i32_0 = arith.constant 0 : i32
    return %arg0, %c0_i32 : i32, i32
  }
}

</mosaic_0001>

<llo_original>
// kernel: net_forward.1
$region0: #{net_forward.1}
  #allocation0 [shape = 'u32[]', space=smem, size = 0x4, offset = 0x4, fixed_abs, tag = 'smem constant byte address 0x4 - core index']
  #allocation1 [shape = 'u32[144,128]{1,0:T(1,128)}', space=vmem, size = 0x12000, scoped, tag = 'internal scratch']
  %s0 = inlined_call_operand.vmem [shape: bf16[8,256], index: 0, kind: input, shape index: {}]
  %s1 = inlined_call_operand.hbm [shape: bf16[256,2048], index: 1, kind: input, shape index: {}]
  %s2 = inlined_call_operand.vmem [shape: f32[1,512], index: 2, kind: input, shape index: {}]
  %s3 = inlined_call_operand.hbm [shape: bf16[512,256], index: 3, kind: input, shape index: {}]
  %s4 = inlined_call_operand.vmem [shape: f32[1,256], index: 4, kind: input, shape index: {}]
  %s5 = inlined_call_operand.hbm [shape: bf16[256,128], index: 5, kind: input, shape index: {}]
  %s6 = inlined_call_operand.vmem [shape: f32[1,128], index: 6, kind: input, shape index: {}]
  %s7 = inlined_call_operand.vmem [shape: f32[8,128], index: 7, kind: output, shape index: {}]
  %s8 = sld [smem:[#allocation0]]
  $region50: #{net_forward.1} parent=0
    _
  %s10 = ssub.s32 1, %s8
  %s11 = scalar_select 0, %s10, %s8
  $region1: #{net_forward.1} parent=0
    #allocation2 [shape = 'u8[1048576]{0}', space=vmem, size = 0x100000, scoped, tag = 'input window, operand 1, single buffered']
    #allocation3 [shape = 's32[1]{0}', space=sflag, size = 0x4, scoped, tag = 'scoped memory for net_forward.1']
    #allocation4 [shape = 'u8[262144]{0}', space=vmem, size = 0x40000, scoped, tag = 'input window, operand 3, single buffered']
    #allocation5 [shape = 's32[1]{0}', space=sflag, size = 0x4, scoped, tag = 'scoped memory for net_forward.1']
    #allocation6 [shape = 'u8[65536]{0}', space=vmem, size = 0x10000, scoped, tag = 'input window, operand 5, single buffered']
    %12 = vsyncpa [#allocation3], 0
    %13 = vsyncpa [#allocation5], 0
    // Predicated region
    $region2: #{net_forward.1} parent=1 // pred_check
      _
    $region3: #{net_forward.1} parent=1 // pred_check_branch
      %15 = sbr.rel (0) target = $region5
    $region4: #{net_forward.1} parent=1 // pred_region
      _
    $region5: #{net_forward.1} parent=1 // pred_fallthru
      _
    // Predicated region
    $region6: #{net_forward.1} parent=1 // pred_check
      _
    $region7: #{net_forward.1} parent=1 // pred_check_branch
      %17 = sbr.rel (0) target = $region9
    $region8: #{net_forward.1} parent=1 // pred_region
      %s19 = ssub.s32 32768, 32768
      %20 = vsyncadd [#allocation3], %s19
      %s21 = sshll.u32 [#allocation2], 4
      %s22 = int_to_ptr.vmem [resolvable:$true] %s21
      %27 = dma.hbm_to_vmem [thread:$0]  %s1, 32768, %s22, [#allocation3], 1024, 1024, 64
    $region9: #{net_forward.1} parent=1 // pred_fallthru
      _
    // Predicated region
    $region10: #{net_forward.1} parent=1 // pred_check
      _
    $region11: #{net_forward.1} parent=1 // pred_check_branch
      %29 = sbr.rel (0) target = $region13
    $region12: #{net_forward.1} parent=1 // pred_region
      _
    $region13: #{net_forward.1} parent=1 // pred_fallthru
      _
    // Predicated region
    $region14: #{net_forward.1} parent=1 // pred_check
      _
    $region15: #{net_forward.1} parent=1 // pred_check_branch
      %31 = sbr.rel (0) target = $region17
    $region16: #{net_forward.1} parent=1 // pred_region
      %s33 = ssub.s32 8192, 8192
      %34 = vsyncadd [#allocation5], %s33
      %s35 = sshll.u32 [#allocation4], 4
      %s36 = int_to_ptr.vmem [resolvable:$true] %s35
      %41 = dma.hbm_to_vmem [thread:$0]  %s3, 8192, %s36, [#allocation5], 128, 128, 8
    $region17: #{net_forward.1} parent=1 // pred_fallthru
      _
    // Predicated region
    $region18: #{net_forward.1} parent=1 // pred_check
      _
    $region19: #{net_forward.1} parent=1 // pred_check_branch
      %43 = sbr.rel (0) target = $region21
    $region20: #{net_forward.1} parent=1 // pred_region
      _
    $region21: #{net_forward.1} parent=1 // pred_fallthru
      _
    // Predicated region
    $region22: #{net_forward.1} parent=1 // pred_check
      _
    $region23: #{net_forward.1} parent=1 // pred_check_branch
      %45 = sbr.rel (0) target = $region25
    $region24: #{net_forward.1} parent=1 // pred_region
      %s47 = ssub.s32 2048, 2048
      %48 = vsyncadd [#allocation5], %s47
      %s49 = sshll.u32 [#allocation6], 4
      %s50 = int_to_ptr.vmem [resolvable:$true] %s49
      %55 = dma.hbm_to_vmem [thread:$0]  %s5, 2048, %s50, [#allocation5], 64, 64, 4
    $region25: #{net_forward.1} parent=1 // pred_fallthru
      _
    // Predicated region
    $region26: #{net_forward.1} parent=1 // pred_check
      _
    $region27: #{net_forward.1} parent=1 // pred_check_branch
      %57 = sbr.rel (0) target = $region29
    $region28: #{net_forward.1} parent=1 // pred_region
      _
    $region29: #{net_forward.1} parent=1 // pred_fallthru
      _
    // Predicated region
    $region30: #{net_forward.1} parent=1 // pred_check
      _
    $region31: #{net_forward.1} parent=1 // pred_check_branch
      %59 = sbr.rel (0) target = $region33
    $region32: #{net_forward.1} parent=1 // pred_region
      %60 = dma.done [#allocation3], 32768
    $region33: #{net_forward.1} parent=1 // pred_fallthru
      _
    // Predicated region
    $region34: #{net_forward.1} parent=1 // pred_check
      _
    $region35: #{net_forward.1} parent=1 // pred_check_branch
      %62 = sbr.rel (0) target = $region37
    $region36: #{net_forward.1} parent=1 // pred_region
      %63 = dma.done [#allocation5], 8192
    $region37: #{net_forward.1} parent=1 // pred_fallthru
      _
    // Predicated region
    $region38: #{net_forward.1} parent=1 // pred_check
      _
    $region39: #{net_forward.1} parent=1 // pred_check_branch
      %65 = sbr.rel (0) target = $region41
    $region40: #{net_forward.1} parent=1 // pred_region
      %66 = dma.done [#allocation5], 2048
    $region41: #{net_forward.1} parent=1 // pred_fallthru
      _
    %v68 = vld [vmem:[%s0] sm:$0xff]
    %v69 = vld [vmem:[#allocation2] sm:$0xff]
    %v70 = vld [vmem:[#allocation2 + $0x8] sm:$0xff]
    %v71 = vld [vmem:[#allocation2 + $0x10] sm:$0xff]
    %v72 = vld [vmem:[#allocation2 + $0x18] sm:$0xff]
    %v73 = vld [vmem:[#allocation2 + $0x20] sm:$0xff]
    %v74 = vld [vmem:[#allocation2 + $0x28] sm:$0xff]
    %v75 = vld [vmem:[#allocation2 + $0x30] sm:$0xff]
    %v76 = vld [vmem:[#allocation2 + $0x38] sm:$0xff]
    %v77 = vld [vmem:[#allocation2 + $0x40] sm:$0xff]
    %v78 = vld [vmem:[#allocation2 + $0x48] sm:$0xff]
    %v79 = vld [vmem:[#allocation2 + $0x50] sm:$0xff]
    %v80 = vld [vmem:[#allocation2 + $0x58] sm:$0xff]
    %v81 = vld [vmem:[#allocation2 + $0x60] sm:$0xff]
    %v82 = vld [vmem:[#allocation2 + $0x68] sm:$0xff]
    %v83 = vld [vmem:[#allocation2 + $0x70] sm:$0xff]
    %v84 = vld [vmem:[#allocation2 + $0x78] sm:$0xff]
    %v85 = vld [vmem:[#allocation2 + $0x80] sm:$0xff]
    %v86 = vld [vmem:[#allocation2 + $0x88] sm:$0xff]
    %v87 = vld [vmem:[#allocation2 + $0x90] sm:$0xff]
    %v88 = vld [vmem:[#allocation2 + $0x98] sm:$0xff]
    %v89 = vld [vmem:[#allocation2 + $0xa0] sm:$0xff]
    %v90 = vld [vmem:[#allocation2 + $0xa8] sm:$0xff]
    %v91 = vld [vmem:[#allocation2 + $0xb0] sm:$0xff]
    %v92 = vld [vmem:[#allocation2 + $0xb8] sm:$0xff]
    %v93 = vld [vmem:[#allocation2 + $0xc0] sm:$0xff]
    %v94 = vld [vmem:[#allocation2 + $0xc8] sm:$0xff]
    %v95 = vld [vmem:[#allocation2 + $0xd0] sm:$0xff]
    %v96 = vld [vmem:[#allocation2 + $0xd8] sm:$0xff]
    %v97 = vld [vmem:[#allocation2 + $0xe0] sm:$0xff]
    %v98 = vld [vmem:[#allocation2 + $0xe8] sm:$0xff]
    %v99 = vld [vmem:[#allocation2 + $0xf0] sm:$0xff]
    %v100 = vld [vmem:[#allocation2 + $0xf8] sm:$0xff]
    %v101 = vld [vmem:[#allocation2 + $0x100] sm:$0xff]
    %v102 = vld [vmem:[#allocation2 + $0x108] sm:$0xff]
    %v103 = vld [vmem:[#allocation2 + $0x110] sm:$0xff]
    %v104 = vld [vmem:[#allocation2 + $0x118] sm:$0xff]
    %v105 = vld [vmem:[#allocation2 + $0x120] sm:$0xff]
    %v106 = vld [vmem:[#allocation2 + $0x128] sm:$0xff]
    %v107 = vld [vmem:[#allocation2 + $0x130] sm:$0xff]
    %v108 = vld [vmem:[#allocation2 + $0x138] sm:$0xff]
    %v109 = vld [vmem:[#allocation2 + $0x140] sm:$0xff]
    %v110 = vld [vmem:[#allocation2 + $0x148] sm:$0xff]
    %v111 = vld [vmem:[#allocation2 + $0x150] sm:$0xff]
    %v112 = vld [vmem:[#allocation2 + $0x158] sm:$0xff]
    %v113 = vld [vmem:[#allocation2 + $0x160] sm:$0xff]
    %v114 = vld [vmem:[#allocation2 + $0x168] sm:$0xff]
    %v115 = vld [vmem:[#allocation2 + $0x170] sm:$0xff]
    %v116 = vld [vmem:[#allocation2 + $0x178] sm:$0xff]
    %v117 = vld [vmem:[#allocation2 + $0x180] sm:$0xff]
    %v118 = vld [vmem:[#allocation2 + $0x188] sm:$0xff]
    %v119 = vld [vmem:[#allocation2 + $0x190] sm:$0xff]
    %v120 = vld [vmem:[#allocation2 + $0x198] sm:$0xff]
    %v121 = vld [vmem:[#allocation2 + $0x1a0] sm:$0xff]
    %v122 = vld [vmem:[#allocation2 + $0x1a8] sm:$0xff]
    %v123 = vld [vmem:[#allocation2 + $0x1b0] sm:$0xff]
    %v124 = vld [vmem:[#allocation2 + $0x1b8] sm:$0xff]
    %v125 = vld [vmem:[#allocation2 + $0x1c0] sm:$0xff]
    %v126 = vld [vmem:[#allocation2 + $0x1c8] sm:$0xff]
    %v127 = vld [vmem:[#allocation2 + $0x1d0] sm:$0xff]
    %v128 = vld [vmem:[#allocation2 + $0x1d8] sm:$0xff]
    %v129 = vld [vmem:[#allocation2 + $0x1e0] sm:$0xff]
    %v130 = vld [vmem:[#allocation2 + $0x1e8] sm:$0xff]
    %v131 = vld [vmem:[#allocation2 + $0x1f0] sm:$0xff]
    %v132 = vld [vmem:[#allocation2 + $0x1f8] sm:$0xff]
    %v133 = vld [vmem:[#allocation2 + $0x200] sm:$0xff]
    %v134 = vld [vmem:[#allocation2 + $0x208] sm:$0xff]
    %v135 = vld [vmem:[#allocation2 + $0x210] sm:$0xff]
    %v136 = vld [vmem:[#allocation2 + $0x218] sm:$0xff]
    %v137 = vld [vmem:[#allocation2 + $0x220] sm:$0xff]
    %v138 = vld [vmem:[#allocation2 + $0x228] sm:$0xff]
    %v139 = vld [vmem:[#allocation2 + $0x230] sm:$0xff]
    %v140 = vld [vmem:[#allocation2 + $0x238] sm:$0xff]
    %v141 = vld [vmem:[#allocation2 + $0x240] sm:$0xff]
    %v142 = vld [vmem:[#allocation2 + $0x248] sm:$0xff]
    %v143 = vld [vmem:[#allocation2 + $0x250] sm:$0xff]
    %v144 = vld [vmem:[#allocation2 + $0x258] sm:$0xff]
    %v145 = vld [vmem:[#allocation2 + $0x260] sm:$0xff]
    %v146 = vld [vmem:[#allocation2 + $0x268] sm:$0xff]
    %v147 = vld [vmem:[#allocation2 + $0x270] sm:$0xff]
    %v148 = vld [vmem:[#allocation2 + $0x278] sm:$0xff]
    %v149 = vld [vmem:[#allocation2 + $0x280] sm:$0xff]
    %v150 = vld [vmem:[#allocation2 + $0x288] sm:$0xff]
    %v151 = vld [vmem:[#allocation2 + $0x290] sm:$0xff]
    %v152 = vld [vmem:[#allocation2 + $0x298] sm:$0xff]
    %v153 = vld [vmem:[#allocation2 + $0x2a0] sm:$0xff]
    %v154 = vld [vmem:[#allocation2 + $0x2a8] sm:$0xff]
    %v155 = vld [vmem:[#allocation2 + $0x2b0] sm:$0xff]
    %v156 = vld [vmem:[#allocation2 + $0x2b8] sm:$0xff]
    %v157 = vld [vmem:[#allocation2 + $0x2c0] sm:$0xff]
    %v158 = vld [vmem:[#allocation2 + $0x2c8] sm:$0xff]
    %v159 = vld [vmem:[#allocation2 + $0x2d0] sm:$0xff]
    %v160 = vld [vmem:[#allocation2 + $0x2d8] sm:$0xff]
    %v161 = vld [vmem:[#allocation2 + $0x2e0] sm:$0xff]
    %v162 = vld [vmem:[#allocation2 + $0x2e8] sm:$0xff]
    %v163 = vld [vmem:[#allocation2 + $0x2f0] sm:$0xff]
    %v164 = vld [vmem:[#allocation2 + $0x2f8] sm:$0xff]
    %v165 = vld [vmem:[#allocation2 + $0x300] sm:$0xff]
    %v166 = vld [vmem:[#allocation2 + $0x308] sm:$0xff]
    %v167 = vld [vmem:[#allocation2 + $0x310] sm:$0xff]
    %v168 = vld [vmem:[#allocation2 + $0x318] sm:$0xff]
    %v169 = vld [vmem:[#allocation2 + $0x320] sm:$0xff]
    %v170 = vld [vmem:[#allocation2 + $0x328] sm:$0xff]
    %v171 = vld [vmem:[#allocation2 + $0x330] sm:$0xff]
    %v172 = vld [vmem:[#allocation2 + $0x338] sm:$0xff]
    %v173 = vld [vmem:[#allocation2 + $0x340] sm:$0xff]
    %v174 = vld [vmem:[#allocation2 + $0x348] sm:$0xff]
    %v175 = vld [vmem:[#allocation2 + $0x350] sm:$0xff]
    %v176 = vld [vmem:[#allocation2 + $0x358] sm:$0xff]
    %v177 = vld [vmem:[#allocation2 + $0x360] sm:$0xff]
    %v178 = vld [vmem:[#allocation2 + $0x368] sm:$0xff]
    %v179 = vld [vmem:[#allocation2 + $0x370] sm:$0xff]
    %v180 = vld [vmem:[#allocation2 + $0x378] sm:$0xff]
    %v181 = vld [vmem:[#allocation2 + $0x380] sm:$0xff]
    %v182 = vld [vmem:[#allocation2 + $0x388] sm:$0xff]
    %v183 = vld [vmem:[#allocation2 + $0x390] sm:$0xff]
    %v184 = vld [vmem:[#allocation2 + $0x398] sm:$0xff]
    %v185 = vld [vmem:[#allocation2 + $0x3a0] sm:$0xff]
    %v186 = vld [vmem:[#allocation2 + $0x3a8] sm:$0xff]
    %v187 = vld [vmem:[#allocation2 + $0x3b0] sm:$0xff]
    %v188 = vld [vmem:[#allocation2 + $0x3b8] sm:$0xff]
    %v189 = vld [vmem:[#allocation2 + $0x3c0] sm:$0xff]
    %v190 = vld [vmem:[#allocation2 + $0x3c8] sm:$0xff]
    %v191 = vld [vmem:[#allocation2 + $0x3d0] sm:$0xff]
    %v192 = vld [vmem:[#allocation2 + $0x3d8] sm:$0xff]
    %v193 = vld [vmem:[#allocation2 + $0x3e0] sm:$0xff]
    %v194 = vld [vmem:[#allocation2 + $0x3e8] sm:$0xff]
    %v195 = vld [vmem:[#allocation2 + $0x3f0] sm:$0xff]
    %v196 = vld [vmem:[#allocation2 + $0x3f8] sm:$0xff]
    %v197 = vld [vmem:[#allocation2 + $0x400] sm:$0xff]
    %v198 = vld [vmem:[#allocation2 + $0x408] sm:$0xff]
    %v199 = vld [vmem:[#allocation2 + $0x410] sm:$0xff]
    %v200 = vld [vmem:[#allocation2 + $0x418] sm:$0xff]
    %v201 = vld [vmem:[#allocation2 + $0x420] sm:$0xff]
    %v202 = vld [vmem:[#allocation2 + $0x428] sm:$0xff]
    %v203 = vld [vmem:[#allocation2 + $0x430] sm:$0xff]
    %v204 = vld [vmem:[#allocation2 + $0x438] sm:$0xff]
    %v205 = vld [vmem:[#allocation2 + $0x440] sm:$0xff]
    %v206 = vld [vmem:[#allocation2 + $0x448] sm:$0xff]
    %v207 = vld [vmem:[#allocation2 + $0x450] sm:$0xff]
    %v208 = vld [vmem:[#allocation2 + $0x458] sm:$0xff]
    %v209 = vld [vmem:[#allocation2 + $0x460] sm:$0xff]
    %v210 = vld [vmem:[#allocation2 + $0x468] sm:$0xff]
    %v211 = vld [vmem:[#allocation2 + $0x470] sm:$0xff]
    %v212 = vld [vmem:[#allocation2 + $0x478] sm:$0xff]
    %v213 = vld [vmem:[#allocation2 + $0x480] sm:$0xff]
    %v214 = vld [vmem:[#allocation2 + $0x488] sm:$0xff]
    %v215 = vld [vmem:[#allocation2 + $0x490] sm:$0xff]
    %v216 = vld [vmem:[#allocation2 + $0x498] sm:$0xff]
    %v217 = vld [vmem:[#allocation2 + $0x4a0] sm:$0xff]
    %v218 = vld [vmem:[#allocation2 + $0x4a8] sm:$0xff]
    %v219 = vld [vmem:[#allocation2 + $0x4b0] sm:$0xff]
    %v220 = vld [vmem:[#allocation2 + $0x4b8] sm:$0xff]
    %v221 = vld [vmem:[#allocation2 + $0x4c0] sm:$0xff]
    %v222 = vld [vmem:[#allocation2 + $0x4c8] sm:$0xff]
    %v223 = vld [vmem:[#allocation2 + $0x4d0] sm:$0xff]
    %v224 = vld [vmem:[#allocation2 + $0x4d8] sm:$0xff]
    %v225 = vld [vmem:[#allocation2 + $0x4e0] sm:$0xff]
    %v226 = vld [vmem:[#allocation2 + $0x4e8] sm:$0xff]
    %v227 = vld [vmem:[#allocation2 + $0x4f0] sm:$0xff]
    %v228 = vld [vmem:[#allocation2 + $0x4f8] sm:$0xff]
    %v229 = vld [vmem:[#allocation2 + $0x500] sm:$0xff]
    %v230 = vld [vmem:[#allocation2 + $0x508] sm:$0xff]
    %v231 = vld [vmem:[#allocation2 + $0x510] sm:$0xff]
    %v232 = vld [vmem:[#allocation2 + $0x518] sm:$0xff]
    %v233 = vld [vmem:[#allocation2 + $0x520] sm:$0xff]
    %v234 = vld [vmem:[#allocation2 + $0x528] sm:$0xff]
    %v235 = vld [vmem:[#allocation2 + $0x530] sm:$0xff]
    %v236 = vld [vmem:[#allocation2 + $0x538] sm:$0xff]
    %v237 = vld [vmem:[#allocation2 + $0x540] sm:$0xff]
    %v238 = vld [vmem:[#allocation2 + $0x548] sm:$0xff]
    %v239 = vld [vmem:[#allocation2 + $0x550] sm:$0xff]
    %v240 = vld [vmem:[#allocation2 + $0x558] sm:$0xff]
    %v241 = vld [vmem:[#allocation2 + $0x560] sm:$0xff]
    %v242 = vld [vmem:[#allocation2 + $0x568] sm:$0xff]
    %v243 = vld [vmem:[#allocation2 + $0x570] sm:$0xff]
    %v244 = vld [vmem:[#allocation2 + $0x578] sm:$0xff]
    %v245 = vld [vmem:[#allocation2 + $0x580] sm:$0xff]
    %v246 = vld [vmem:[#allocation2 + $0x588] sm:$0xff]
    %v247 = vld [vmem:[#allocation2 + $0x590] sm:$0xff]
    %v248 = vld [vmem:[#allocation2 + $0x598] sm:$0xff]
    %v249 = vld [vmem:[#allocation2 + $0x5a0] sm:$0xff]
    %v250 = vld [vmem:[#allocation2 + $0x5a8] sm:$0xff]
    %v251 = vld [vmem:[#allocation2 + $0x5b0] sm:$0xff]
    %v252 = vld [vmem:[#allocation2 + $0x5b8] sm:$0xff]
    %v253 = vld [vmem:[#allocation2 + $0x5c0] sm:$0xff]
    %v254 = vld [vmem:[#allocation2 + $0x5c8] sm:$0xff]
    %v255 = vld [vmem:[#allocation2 + $0x5d0] sm:$0xff]
    %v256 = vld [vmem:[#allocation2 + $0x5d8] sm:$0xff]
    %v257 = vld [vmem:[#allocation2 + $0x5e0] sm:$0xff]
    %v258 = vld [vmem:[#allocation2 + $0x5e8] sm:$0xff]
    %v259 = vld [vmem:[#allocation2 + $0x5f0] sm:$0xff]
    %v260 = vld [vmem:[#allocation2 + $0x5f8] sm:$0xff]
    %v261 = vld [vmem:[#allocation2 + $0x600] sm:$0xff]
    %v262 = vld [vmem:[#allocation2 + $0x608] sm:$0xff]
    %v263 = vld [vmem:[#allocation2 + $0x610] sm:$0xff]
    %v264 = vld [vmem:[#allocation2 + $0x618] sm:$0xff]
    %v265 = vld [vmem:[#allocation2 + $0x620] sm:$0xff]
    %v266 = vld [vmem:[#allocation2 + $0x628] sm:$0xff]
    %v267 = vld [vmem:[#allocation2 + $0x630] sm:$0xff]
    %v268 = vld [vmem:[#allocation2 + $0x638] sm:$0xff]
    %v269 = vld [vmem:[#allocation2 + $0x640] sm:$0xff]
    %v270 = vld [vmem:[#allocation2 + $0x648] sm:$0xff]
    %v271 = vld [vmem:[#allocation2 + $0x650] sm:$0xff]
    %v272 = vld [vmem:[#allocation2 + $0x658] sm:$0xff]
    %v273 = vld [vmem:[#allocation2 + $0x660] sm:$0xff]
    %v274 = vld [vmem:[#allocation2 + $0x668] sm:$0xff]
    %v275 = vld [vmem:[#allocation2 + $0x670] sm:$0xff]
    %v276 = vld [vmem:[#allocation2 + $0x678] sm:$0xff]
    %v277 = vld [vmem:[#allocation2 + $0x680] sm:$0xff]
    %v278 = vld [vmem:[#allocation2 + $0x688] sm:$0xff]
    %v279 = vld [vmem:[#allocation2 + $0x690] sm:$0xff]
    %v280 = vld [vmem:[#allocation2 + $0x698] sm:$0xff]
    %v281 = vld [vmem:[#allocation2 + $0x6a0] sm:$0xff]
    %v282 = vld [vmem:[#allocation2 + $0x6a8] sm:$0xff]
    %v283 = vld [vmem:[#allocation2 + $0x6b0] sm:$0xff]
    %v284 = vld [vmem:[#allocation2 + $0x6b8] sm:$0xff]
    %v285 = vld [vmem:[#allocation2 + $0x6c0] sm:$0xff]
    %v286 = vld [vmem:[#allocation2 + $0x6c8] sm:$0xff]
    %v287 = vld [vmem:[#allocation2 + $0x6d0] sm:$0xff]
    %v288 = vld [vmem:[#allocation2 + $0x6d8] sm:$0xff]
    %v289 = vld [vmem:[#allocation2 + $0x6e0] sm:$0xff]
    %v290 = vld [vmem:[#allocation2 + $0x6e8] sm:$0xff]
    %v291 = vld [vmem:[#allocation2 + $0x6f0] sm:$0xff]
    %v292 = vld [vmem:[#allocation2 + $0x6f8] sm:$0xff]
    %v293 = vld [vmem:[#allocation2 + $0x700] sm:$0xff]
    %v294 = vld [vmem:[#allocation2 + $0x708] sm:$0xff]
    %v295 = vld [vmem:[#allocation2 + $0x710] sm:$0xff]
    %v296 = vld [vmem:[#allocation2 + $0x718] sm:$0xff]
    %v297 = vld [vmem:[#allocation2 + $0x720] sm:$0xff]
    %v298 = vld [vmem:[#allocation2 + $0x728] sm:$0xff]
    %v299 = vld [vmem:[#allocation2 + $0x730] sm:$0xff]
    %v300 = vld [vmem:[#allocation2 + $0x738] sm:$0xff]
    %v301 = vld [vmem:[#allocation2 + $0x740] sm:$0xff]
    %v302 = vld [vmem:[#allocation2 + $0x748] sm:$0xff]
    %v303 = vld [vmem:[#allocation2 + $0x750] sm:$0xff]
    %v304 = vld [vmem:[#allocation2 + $0x758] sm:$0xff]
    %v305 = vld [vmem:[#allocation2 + $0x760] sm:$0xff]
    %v306 = vld [vmem:[#allocation2 + $0x768] sm:$0xff]
    %v307 = vld [vmem:[#allocation2 + $0x770] sm:$0xff]
    %v308 = vld [vmem:[#allocation2 + $0x778] sm:$0xff]
    %v309 = vld [vmem:[#allocation2 + $0x780] sm:$0xff]
    %v310 = vld [vmem:[#allocation2 + $0x788] sm:$0xff]
    %v311 = vld [vmem:[#allocation2 + $0x790] sm:$0xff]
    %v312 = vld [vmem:[#allocation2 + $0x798] sm:$0xff]
    %v313 = vld [vmem:[#allocation2 + $0x7a0] sm:$0xff]
    %v314 = vld [vmem:[#allocation2 + $0x7a8] sm:$0xff]
    %v315 = vld [vmem:[#allocation2 + $0x7b0] sm:$0xff]
    %v316 = vld [vmem:[#allocation2 + $0x7b8] sm:$0xff]
    %v317 = vld [vmem:[#allocation2 + $0x7c0] sm:$0xff]
    %v318 = vld [vmem:[#allocation2 + $0x7c8] sm:$0xff]
    %v319 = vld [vmem:[#allocation2 + $0x7d0] sm:$0xff]
    %v320 = vld [vmem:[#allocation2 + $0x7d8] sm:$0xff]
    %v321 = vld [vmem:[#allocation2 + $0x7e0] sm:$0xff]
    %v322 = vld [vmem:[#allocation2 + $0x7e8] sm:$0xff]
    %v323 = vld [vmem:[#allocation2 + $0x7f0] sm:$0xff]
    %v324 = vld [vmem:[#allocation2 + $0x7f8] sm:$0xff]
    %v326 = vunpack.c.l.b16 %v68
    %v327 = vunpack.c.h.b16 %v68
    %v328 = vpack.c.b16 %v326, %v326
    %v329 = vpack.c.b16 %v327, %v327
    %v588 = vunpack.c.l.b16 %v69
    %v589 = vunpack.c.h.b16 %v69
    %v590 = vunpack.c.l.b16 %v70
    %v591 = vunpack.c.h.b16 %v70
    %v592 = vunpack.c.l.b16 %v71
    %v593 = vunpack.c.h.b16 %v71
    %v594 = vunpack.c.l.b16 %v72
    %v595 = vunpack.c.h.b16 %v72
    %v596 = vunpack.c.l.b16 %v73
    %v597 = vunpack.c.h.b16 %v73
    %v598 = vunpack.c.l.b16 %v74
    %v599 = vunpack.c.h.b16 %v74
    %v600 = vunpack.c.l.b16 %v75
    %v601 = vunpack.c.h.b16 %v75
    %v602 = vunpack.c.l.b16 %v76
    %v603 = vunpack.c.h.b16 %v76
    %v604 = vunpack.c.l.b16 %v77
    %v605 = vunpack.c.h.b16 %v77
    %v606 = vunpack.c.l.b16 %v78
    %v607 = vunpack.c.h.b16 %v78
    %v608 = vunpack.c.l.b16 %v79
    %v609 = vunpack.c.h.b16 %v79
    %v610 = vunpack.c.l.b16 %v80
    %v611 = vunpack.c.h.b16 %v80
    %v612 = vunpack.c.l.b16 %v81
    %v613 = vunpack.c.h.b16 %v81
    %v614 = vunpack.c.l.b16 %v82
    %v615 = vunpack.c.h.b16 %v82
    %v616 = vunpack.c.l.b16 %v83
    %v617 = vunpack.c.h.b16 %v83
    %v618 = vunpack.c.l.b16 %v84
    %v619 = vunpack.c.h.b16 %v84
    %v620 = vunpack.c.l.b16 %v85
    %v621 = vunpack.c.h.b16 %v85
    %v622 = vunpack.c.l.b16 %v86
    %v623 = vunpack.c.h.b16 %v86
    %v624 = vunpack.c.l.b16 %v87
    %v625 = vunpack.c.h.b16 %v87
    %v626 = vunpack.c.l.b16 %v88
    %v627 = vunpack.c.h.b16 %v88
    %v628 = vunpack.c.l.b16 %v89
    %v629 = vunpack.c.h.b16 %v89
    %v630 = vunpack.c.l.b16 %v90
    %v631 = vunpack.c.h.b16 %v90
    %v632 = vunpack.c.l.b16 %v91
    %v633 = vunpack.c.h.b16 %v91
    %v634 = vunpack.c.l.b16 %v92
    %v635 = vunpack.c.h.b16 %v92
    %v636 = vunpack.c.l.b16 %v93
    %v637 = vunpack.c.h.b16 %v93
    %v638 = vunpack.c.l.b16 %v94
    %v639 = vunpack.c.h.b16 %v94
    %v640 = vunpack.c.l.b16 %v95
    %v641 = vunpack.c.h.b16 %v95
    %v642 = vunpack.c.l.b16 %v96
    %v643 = vunpack.c.h.b16 %v96
    %v644 = vunpack.c.l.b16 %v97
    %v645 = vunpack.c.h.b16 %v97
    %v646 = vunpack.c.l.b16 %v98
    %v647 = vunpack.c.h.b16 %v98
    %v648 = vunpack.c.l.b16 %v99
    %v649 = vunpack.c.h.b16 %v99
    %v650 = vunpack.c.l.b16 %v100
    %v651 = vunpack.c.h.b16 %v100
    %v652 = vunpack.c.l.b16 %v101
    %v653 = vunpack.c.h.b16 %v101
    %v654 = vunpack.c.l.b16 %v102
    %v655 = vunpack.c.h.b16 %v102
    %v656 = vunpack.c.l.b16 %v103
    %v657 = vunpack.c.h.b16 %v103
    %v658 = vunpack.c.l.b16 %v104
    %v659 = vunpack.c.h.b16 %v104
    %v660 = vunpack.c.l.b16 %v105
    %v661 = vunpack.c.h.b16 %v105
    %v662 = vunpack.c.l.b16 %v106
    %v663 = vunpack.c.h.b16 %v106
    %v664 = vunpack.c.l.b16 %v107
    %v665 = vunpack.c.h.b16 %v107
    %v666 = vunpack.c.l.b16 %v108
    %v667 = vunpack.c.h.b16 %v108
    %v668 = vunpack.c.l.b16 %v109
    %v669 = vunpack.c.h.b16 %v109
    %v670 = vunpack.c.l.b16 %v110
    %v671 = vunpack.c.h.b16 %v110
    %v672 = vunpack.c.l.b16 %v111
    %v673 = vunpack.c.h.b16 %v111
    %v674 = vunpack.c.l.b16 %v112
    %v675 = vunpack.c.h.b16 %v112
    %v676 = vunpack.c.l.b16 %v113
    %v677 = vunpack.c.h.b16 %v113
    %v678 = vunpack.c.l.b16 %v114
    %v679 = vunpack.c.h.b16 %v114
    %v680 = vunpack.c.l.b16 %v115
    %v681 = vunpack.c.h.b16 %v115
    %v682 = vunpack.c.l.b16 %v116
    %v683 = vunpack.c.h.b16 %v116
    %v684 = vunpack.c.l.b16 %v117
    %v685 = vunpack.c.h.b16 %v117
    %v686 = vunpack.c.l.b16 %v118
    %v687 = vunpack.c.h.b16 %v118
    %v688 = vunpack.c.l.b16 %v119
    %v689 = vunpack.c.h.b16 %v119
    %v690 = vunpack.c.l.b16 %v120
    %v691 = vunpack.c.h.b16 %v120
    %v692 = vunpack.c.l.b16 %v121
    %v693 = vunpack.c.h.b16 %v121
    %v694 = vunpack.c.l.b16 %v122
    %v695 = vunpack.c.h.b16 %v122
    %v696 = vunpack.c.l.b16 %v123
    %v697 = vunpack.c.h.b16 %v123
    %v698 = vunpack.c.l.b16 %v124
    %v699 = vunpack.c.h.b16 %v124
    %v700 = vunpack.c.l.b16 %v125
    %v701 = vunpack.c.h.b16 %v125
    %v702 = vunpack.c.l.b16 %v126
    %v703 = vunpack.c.h.b16 %v126
    %v704 = vunpack.c.l.b16 %v127
    %v705 = vunpack.c.h.b16 %v127
    %v706 = vunpack.c.l.b16 %v128
    %v707 = vunpack.c.h.b16 %v128
    %v708 = vunpack.c.l.b16 %v129
    %v709 = vunpack.c.h.b16 %v129
    %v710 = vunpack.c.l.b16 %v130
    %v711 = vunpack.c.h.b16 %v130
    %v712 = vunpack.c.l.b16 %v131
    %v713 = vunpack.c.h.b16 %v131
    %v714 = vunpack.c.l.b16 %v132
    %v715 = vunpack.c.h.b16 %v132
    %v716 = vunpack.c.l.b16 %v133
    %v717 = vunpack.c.h.b16 %v133
    %v718 = vunpack.c.l.b16 %v134
    %v719 = vunpack.c.h.b16 %v134
    %v720 = vunpack.c.l.b16 %v135
    %v721 = vunpack.c.h.b16 %v135
    %v722 = vunpack.c.l.b16 %v136
    %v723 = vunpack.c.h.b16 %v136
    %v724 = vunpack.c.l.b16 %v137
    %v725 = vunpack.c.h.b16 %v137
    %v726 = vunpack.c.l.b16 %v138
    %v727 = vunpack.c.h.b16 %v138
    %v728 = vunpack.c.l.b16 %v139
    %v729 = vunpack.c.h.b16 %v139
    %v730 = vunpack.c.l.b16 %v140
    %v731 = vunpack.c.h.b16 %v140
    %v732 = vunpack.c.l.b16 %v141
    %v733 = vunpack.c.h.b16 %v141
    %v734 = vunpack.c.l.b16 %v142
    %v735 = vunpack.c.h.b16 %v142
    %v736 = vunpack.c.l.b16 %v143
    %v737 = vunpack.c.h.b16 %v143
    %v738 = vunpack.c.l.b16 %v144
    %v739 = vunpack.c.h.b16 %v144
    %v740 = vunpack.c.l.b16 %v145
    %v741 = vunpack.c.h.b16 %v145
    %v742 = vunpack.c.l.b16 %v146
    %v743 = vunpack.c.h.b16 %v146
    %v744 = vunpack.c.l.b16 %v147
    %v745 = vunpack.c.h.b16 %v147
    %v746 = vunpack.c.l.b16 %v148
    %v747 = vunpack.c.h.b16 %v148
    %v748 = vunpack.c.l.b16 %v149
    %v749 = vunpack.c.h.b16 %v149
    %v750 = vunpack.c.l.b16 %v150
    %v751 = vunpack.c.h.b16 %v150
    %v752 = vunpack.c.l.b16 %v151
    %v753 = vunpack.c.h.b16 %v151
    %v754 = vunpack.c.l.b16 %v152
    %v755 = vunpack.c.h.b16 %v152
    %v756 = vunpack.c.l.b16 %v153
    %v757 = vunpack.c.h.b16 %v153
    %v758 = vunpack.c.l.b16 %v154
    %v759 = vunpack.c.h.b16 %v154
    %v760 = vunpack.c.l.b16 %v155
    %v761 = vunpack.c.h.b16 %v155
    %v762 = vunpack.c.l.b16 %v156
    %v763 = vunpack.c.h.b16 %v156
    %v764 = vunpack.c.l.b16 %v157
    %v765 = vunpack.c.h.b16 %v157
    %v766 = vunpack.c.l.b16 %v158
    %v767 = vunpack.c.h.b16 %v158
    %v768 = vunpack.c.l.b16 %v159
    %v769 = vunpack.c.h.b16 %v159
    %v770 = vunpack.c.l.b16 %v160
    %v771 = vunpack.c.h.b16 %v160
    %v772 = vunpack.c.l.b16 %v161
    %v773 = vunpack.c.h.b16 %v161
    %v774 = vunpack.c.l.b16 %v162
    %v775 = vunpack.c.h.b16 %v162
    %v776 = vunpack.c.l.b16 %v163
    %v777 = vunpack.c.h.b16 %v163
    %v778 = vunpack.c.l.b16 %v164
    %v779 = vunpack.c.h.b16 %v164
    %v780 = vunpack.c.l.b16 %v165
    %v781 = vunpack.c.h.b16 %v165
    %v782 = vunpack.c.l.b16 %v166
    %v783 = vunpack.c.h.b16 %v166
    %v784 = vunpack.c.l.b16 %v167
    %v785 = vunpack.c.h.b16 %v167
    %v786 = vunpack.c.l.b16 %v168
    %v787 = vunpack.c.h.b16 %v168
    %v788 = vunpack.c.l.b16 %v169
    %v789 = vunpack.c.h.b16 %v169
    %v790 = vunpack.c.l.b16 %v170
    %v791 = vunpack.c.h.b16 %v170
    %v792 = vunpack.c.l.b16 %v171
    %v793 = vunpack.c.h.b16 %v171
    %v794 = vunpack.c.l.b16 %v172
    %v795 = vunpack.c.h.b16 %v172
    %v796 = vunpack.c.l.b16 %v173
    %v797 = vunpack.c.h.b16 %v173
    %v798 = vunpack.c.l.b16 %v174
    %v799 = vunpack.c.h.b16 %v174
    %v800 = vunpack.c.l.b16 %v175
    %v801 = vunpack.c.h.b16 %v175
    %v802 = vunpack.c.l.b16 %v176
    %v803 = vunpack.c.h.b16 %v176
    %v804 = vunpack.c.l.b16 %v177
    %v805 = vunpack.c.h.b16 %v177
    %v806 = vunpack.c.l.b16 %v178
    %v807 = vunpack.c.h.b16 %v178
    %v808 = vunpack.c.l.b16 %v179
    %v809 = vunpack.c.h.b16 %v179
    %v810 = vunpack.c.l.b16 %v180
    %v811 = vunpack.c.h.b16 %v180
    %v812 = vunpack.c.l.b16 %v181
    %v813 = vunpack.c.h.b16 %v181
    %v814 = vunpack.c.l.b16 %v182
    %v815 = vunpack.c.h.b16 %v182
    %v816 = vunpack.c.l.b16 %v183
    %v817 = vunpack.c.h.b16 %v183
    %v818 = vunpack.c.l.b16 %v184
    %v819 = vunpack.c.h.b16 %v184
    %v820 = vunpack.c.l.b16 %v185
    %v821 = vunpack.c.h.b16 %v185
    %v822 = vunpack.c.l.b16 %v186
    %v823 = vunpack.c.h.b16 %v186
    %v824 = vunpack.c.l.b16 %v187
    %v825 = vunpack.c.h.b16 %v187
    %v826 = vunpack.c.l.b16 %v188
    %v827 = vunpack.c.h.b16 %v188
    %v828 = vunpack.c.l.b16 %v189
    %v829 = vunpack.c.h.b16 %v189
    %v830 = vunpack.c.l.b16 %v190
    %v831 = vunpack.c.h.b16 %v190
    %v832 = vunpack.c.l.b16 %v191
    %v833 = vunpack.c.h.b16 %v191
    %v834 = vunpack.c.l.b16 %v192
    %v835 = vunpack.c.h.b16 %v192
    %v836 = vunpack.c.l.b16 %v193
    %v837 = vunpack.c.h.b16 %v193
    %v838 = vunpack.c.l.b16 %v194
    %v839 = vunpack.c.h.b16 %v194
    %v840 = vunpack.c.l.b16 %v195
    %v841 = vunpack.c.h.b16 %v195
    %v842 = vunpack.c.l.b16 %v196
    %v843 = vunpack.c.h.b16 %v196
    %v844 = vunpack.c.l.b16 %v197
    %v845 = vunpack.c.h.b16 %v197
    %v846 = vunpack.c.l.b16 %v198
    %v847 = vunpack.c.h.b16 %v198
    %v848 = vunpack.c.l.b16 %v199
    %v849 = vunpack.c.h.b16 %v199
    %v850 = vunpack.c.l.b16 %v200
    %v851 = vunpack.c.h.b16 %v200
    %v852 = vunpack.c.l.b16 %v201
    %v853 = vunpack.c.h.b16 %v201
    %v854 = vunpack.c.l.b16 %v202
    %v855 = vunpack.c.h.b16 %v202
    %v856 = vunpack.c.l.b16 %v203
    %v857 = vunpack.c.h.b16 %v203
    %v858 = vunpack.c.l.b16 %v204
    %v859 = vunpack.c.h.b16 %v204
    %v860 = vunpack.c.l.b16 %v205
    %v861 = vunpack.c.h.b16 %v205
    %v862 = vunpack.c.l.b16 %v206
    %v863 = vunpack.c.h.b16 %v206
    %v864 = vunpack.c.l.b16 %v207
    %v865 = vunpack.c.h.b16 %v207
    %v866 = vunpack.c.l.b16 %v208
    %v867 = vunpack.c.h.b16 %v208
    %v868 = vunpack.c.l.b16 %v209
    %v869 = vunpack.c.h.b16 %v209
    %v870 = vunpack.c.l.b16 %v210
    %v871 = vunpack.c.h.b16 %v210
    %v872 = vunpack.c.l.b16 %v211
    %v873 = vunpack.c.h.b16 %v211
    %v874 = vunpack.c.l.b16 %v212
    %v875 = vunpack.c.h.b16 %v212
    %v876 = vunpack.c.l.b16 %v213
    %v877 = vunpack.c.h.b16 %v213
    %v878 = vunpack.c.l.b16 %v214
    %v879 = vunpack.c.h.b16 %v214
    %v880 = vunpack.c.l.b16 %v215
    %v881 = vunpack.c.h.b16 %v215
    %v882 = vunpack.c.l.b16 %v216
    %v883 = vunpack.c.h.b16 %v216
    %v884 = vunpack.c.l.b16 %v217
    %v885 = vunpack.c.h.b16 %v217
    %v886 = vunpack.c.l.b16 %v218
    %v887 = vunpack.c.h.b16 %v218
    %v888 = vunpack.c.l.b16 %v219
    %v889 = vunpack.c.h.b16 %v219
    %v890 = vunpack.c.l.b16 %v220
    %v891 = vunpack.c.h.b16 %v220
    %v892 = vunpack.c.l.b16 %v221
    %v893 = vunpack.c.h.b16 %v221
    %v894 = vunpack.c.l.b16 %v222
    %v895 = vunpack.c.h.b16 %v222
    %v896 = vunpack.c.l.b16 %v223
    %v897 = vunpack.c.h.b16 %v223
    %v898 = vunpack.c.l.b16 %v224
    %v899 = vunpack.c.h.b16 %v224
    %v900 = vunpack.c.l.b16 %v225
    %v901 = vunpack.c.h.b16 %v225
    %v902 = vunpack.c.l.b16 %v226
    %v903 = vunpack.c.h.b16 %v226
    %v904 = vunpack.c.l.b16 %v227
    %v905 = vunpack.c.h.b16 %v227
    %v906 = vunpack.c.l.b16 %v228
    %v907 = vunpack.c.h.b16 %v228
    %v908 = vunpack.c.l.b16 %v229
    %v909 = vunpack.c.h.b16 %v229
    %v910 = vunpack.c.l.b16 %v230
    %v911 = vunpack.c.h.b16 %v230
    %v912 = vunpack.c.l.b16 %v231
    %v913 = vunpack.c.h.b16 %v231
    %v914 = vunpack.c.l.b16 %v232
    %v915 = vunpack.c.h.b16 %v232
    %v916 = vunpack.c.l.b16 %v233
    %v917 = vunpack.c.h.b16 %v233
    %v918 = vunpack.c.l.b16 %v234
    %v919 = vunpack.c.h.b16 %v234
    %v920 = vunpack.c.l.b16 %v235
    %v921 = vunpack.c.h.b16 %v235
    %v922 = vunpack.c.l.b16 %v236
    %v923 = vunpack.c.h.b16 %v236
    %v924 = vunpack.c.l.b16 %v237
    %v925 = vunpack.c.h.b16 %v237
    %v926 = vunpack.c.l.b16 %v238
    %v927 = vunpack.c.h.b16 %v238
    %v928 = vunpack.c.l.b16 %v239
    %v929 = vunpack.c.h.b16 %v239
    %v930 = vunpack.c.l.b16 %v240
    %v931 = vunpack.c.h.b16 %v240
    %v932 = vunpack.c.l.b16 %v241
    %v933 = vunpack.c.h.b16 %v241
    %v934 = vunpack.c.l.b16 %v242
    %v935 = vunpack.c.h.b16 %v242
    %v936 = vunpack.c.l.b16 %v243
    %v937 = vunpack.c.h.b16 %v243
    %v938 = vunpack.c.l.b16 %v244
    %v939 = vunpack.c.h.b16 %v244
    %v940 = vunpack.c.l.b16 %v245
    %v941 = vunpack.c.h.b16 %v245
    %v942 = vunpack.c.l.b16 %v246
    %v943 = vunpack.c.h.b16 %v246
    %v944 = vunpack.c.l.b16 %v247
    %v945 = vunpack.c.h.b16 %v247
    %v946 = vunpack.c.l.b16 %v248
    %v947 = vunpack.c.h.b16 %v248
    %v948 = vunpack.c.l.b16 %v249
    %v949 = vunpack.c.h.b16 %v249
    %v950 = vunpack.c.l.b16 %v250
    %v951 = vunpack.c.h.b16 %v250
    %v952 = vunpack.c.l.b16 %v251
    %v953 = vunpack.c.h.b16 %v251
    %v954 = vunpack.c.l.b16 %v252
    %v955 = vunpack.c.h.b16 %v252
    %v956 = vunpack.c.l.b16 %v253
    %v957 = vunpack.c.h.b16 %v253
    %v958 = vunpack.c.l.b16 %v254
    %v959 = vunpack.c.h.b16 %v254
    %v960 = vunpack.c.l.b16 %v255
    %v961 = vunpack.c.h.b16 %v255
    %v962 = vunpack.c.l.b16 %v256
    %v963 = vunpack.c.h.b16 %v256
    %v964 = vunpack.c.l.b16 %v257
    %v965 = vunpack.c.h.b16 %v257
    %v966 = vunpack.c.l.b16 %v258
    %v967 = vunpack.c.h.b16 %v258
    %v968 = vunpack.c.l.b16 %v259
    %v969 = vunpack.c.h.b16 %v259
    %v970 = vunpack.c.l.b16 %v260
    %v971 = vunpack.c.h.b16 %v260
    %v972 = vunpack.c.l.b16 %v261
    %v973 = vunpack.c.h.b16 %v261
    %v974 = vunpack.c.l.b16 %v262
    %v975 = vunpack.c.h.b16 %v262
    %v976 = vunpack.c.l.b16 %v263
    %v977 = vunpack.c.h.b16 %v263
    %v978 = vunpack.c.l.b16 %v264
    %v979 = vunpack.c.h.b16 %v264
    %v980 = vunpack.c.l.b16 %v265
    %v981 = vunpack.c.h.b16 %v265
    %v982 = vunpack.c.l.b16 %v266
    %v983 = vunpack.c.h.b16 %v266
    %v984 = vunpack.c.l.b16 %v267
    %v985 = vunpack.c.h.b16 %v267
    %v986 = vunpack.c.l.b16 %v268
    %v987 = vunpack.c.h.b16 %v268
    %v988 = vunpack.c.l.b16 %v269
    %v989 = vunpack.c.h.b16 %v269
    %v990 = vunpack.c.l.b16 %v270
    %v991 = vunpack.c.h.b16 %v270
    %v992 = vunpack.c.l.b16 %v271
    %v993 = vunpack.c.h.b16 %v271
    %v994 = vunpack.c.l.b16 %v272
    %v995 = vunpack.c.h.b16 %v272
    %v996 = vunpack.c.l.b16 %v273
    %v997 = vunpack.c.h.b16 %v273
    %v998 = vunpack.c.l.b16 %v274
    %v999 = vunpack.c.h.b16 %v274
    %v1000 = vunpack.c.l.b16 %v275
    %v1001 = vunpack.c.h.b16 %v275
    %v1002 = vunpack.c.l.b16 %v276
    %v1003 = vunpack.c.h.b16 %v276
    %v1004 = vunpack.c.l.b16 %v277
    %v1005 = vunpack.c.h.b16 %v277
    %v1006 = vunpack.c.l.b16 %v278
    %v1007 = vunpack.c.h.b16 %v278
    %v1008 = vunpack.c.l.b16 %v279
    %v1009 = vunpack.c.h.b16 %v279
    %v1010 = vunpack.c.l.b16 %v280
    %v1011 = vunpack.c.h.b16 %v280
    %v1012 = vunpack.c.l.b16 %v281
    %v1013 = vunpack.c.h.b16 %v281
    %v1014 = vunpack.c.l.b16 %v282
    %v1015 = vunpack.c.h.b16 %v282
    %v1016 = vunpack.c.l.b16 %v283
    %v1017 = vunpack.c.h.b16 %v283
    %v1018 = vunpack.c.l.b16 %v284
    %v1019 = vunpack.c.h.b16 %v284
    %v1020 = vunpack.c.l.b16 %v285
    %v1021 = vunpack.c.h.b16 %v285
    %v1022 = vunpack.c.l.b16 %v286
    %v1023 = vunpack.c.h.b16 %v286
    %v1024 = vunpack.c.l.b16 %v287
    %v1025 = vunpack.c.h.b16 %v287
    %v1026 = vunpack.c.l.b16 %v288
    %v1027 = vunpack.c.h.b16 %v288
    %v1028 = vunpack.c.l.b16 %v289
    %v1029 = vunpack.c.h.b16 %v289
    %v1030 = vunpack.c.l.b16 %v290
    %v1031 = vunpack.c.h.b16 %v290
    %v1032 = vunpack.c.l.b16 %v291
    %v1033 = vunpack.c.h.b16 %v291
    %v1034 = vunpack.c.l.b16 %v292
    %v1035 = vunpack.c.h.b16 %v292
    %v1036 = vunpack.c.l.b16 %v293
    %v1037 = vunpack.c.h.b16 %v293
    %v1038 = vunpack.c.l.b16 %v294
    %v1039 = vunpack.c.h.b16 %v294
    %v1040 = vunpack.c.l.b16 %v295
    %v1041 = vunpack.c.h.b16 %v295
    %v1042 = vunpack.c.l.b16 %v296
    %v1043 = vunpack.c.h.b16 %v296
    %v1044 = vunpack.c.l.b16 %v297
    %v1045 = vunpack.c.h.b16 %v297
    %v1046 = vunpack.c.l.b16 %v298
    %v1047 = vunpack.c.h.b16 %v298
    %v1048 = vunpack.c.l.b16 %v299
    %v1049 = vunpack.c.h.b16 %v299
    %v1050 = vunpack.c.l.b16 %v300
    %v1051 = vunpack.c.h.b16 %v300
    %v1052 = vunpack.c.l.b16 %v301
    %v1053 = vunpack.c.h.b16 %v301
    %v1054 = vunpack.c.l.b16 %v302
    %v1055 = vunpack.c.h.b16 %v302
    %v1056 = vunpack.c.l.b16 %v303
    %v1057 = vunpack.c.h.b16 %v303
    %v1058 = vunpack.c.l.b16 %v304
    %v1059 = vunpack.c.h.b16 %v304
    %v1060 = vunpack.c.l.b16 %v305
    %v1061 = vunpack.c.h.b16 %v305
    %v1062 = vunpack.c.l.b16 %v306
    %v1063 = vunpack.c.h.b16 %v306
    %v1064 = vunpack.c.l.b16 %v307
    %v1065 = vunpack.c.h.b16 %v307
    %v1066 = vunpack.c.l.b16 %v308
    %v1067 = vunpack.c.h.b16 %v308
    %v1068 = vunpack.c.l.b16 %v309
    %v1069 = vunpack.c.h.b16 %v309
    %v1070 = vunpack.c.l.b16 %v310
    %v1071 = vunpack.c.h.b16 %v310
    %v1072 = vunpack.c.l.b16 %v311
    %v1073 = vunpack.c.h.b16 %v311
    %v1074 = vunpack.c.l.b16 %v312
    %v1075 = vunpack.c.h.b16 %v312
    %v1076 = vunpack.c.l.b16 %v313
    %v1077 = vunpack.c.h.b16 %v313
    %v1078 = vunpack.c.l.b16 %v314
    %v1079 = vunpack.c.h.b16 %v314
    %v1080 = vunpack.c.l.b16 %v315
    %v1081 = vunpack.c.h.b16 %v315
    %v1082 = vunpack.c.l.b16 %v316
    %v1083 = vunpack.c.h.b16 %v316
    %v1084 = vunpack.c.l.b16 %v317
    %v1085 = vunpack.c.h.b16 %v317
    %v1086 = vunpack.c.l.b16 %v318
    %v1087 = vunpack.c.h.b16 %v318
    %v1088 = vunpack.c.l.b16 %v319
    %v1089 = vunpack.c.h.b16 %v319
    %v1090 = vunpack.c.l.b16 %v320
    %v1091 = vunpack.c.h.b16 %v320
    %v1092 = vunpack.c.l.b16 %v321
    %v1093 = vunpack.c.h.b16 %v321
    %v1094 = vunpack.c.l.b16 %v322
    %v1095 = vunpack.c.h.b16 %v322
    %v1096 = vunpack.c.l.b16 %v323
    %v1097 = vunpack.c.h.b16 %v323
    %v1098 = vunpack.c.l.b16 %v324
    %v1099 = vunpack.c.h.b16 %v324
    %v1100 = vpack.c.b16 %v604, %v588
    %v1101 = vpack.c.b16 %v605, %v589
    %v1102 = vpack.c.b16 %v606, %v590
    %v1103 = vpack.c.b16 %v607, %v591
    %v1104 = vpack.c.b16 %v608, %v592
    %v1105 = vpack.c.b16 %v609, %v593
    %v1106 = vpack.c.b16 %v610, %v594
    %v1107 = vpack.c.b16 %v611, %v595
    %v1108 = vpack.c.b16 %v612, %v596
    %v1109 = vpack.c.b16 %v613, %v597
    %v1110 = vpack.c.b16 %v614, %v598
    %v1111 = vpack.c.b16 %v615, %v599
    %v1112 = vpack.c.b16 %v616, %v600
    %v1113 = vpack.c.b16 %v617, %v601
    %v1114 = vpack.c.b16 %v618, %v602
    %v1115 = vpack.c.b16 %v619, %v603
    %v1116 = vpack.c.b16 %v636, %v620
    %v1117 = vpack.c.b16 %v637, %v621
    %v1118 = vpack.c.b16 %v638, %v622
    %v1119 = vpack.c.b16 %v639, %v623
    %v1120 = vpack.c.b16 %v640, %v624
    %v1121 = vpack.c.b16 %v641, %v625
    %v1122 = vpack.c.b16 %v642, %v626
    %v1123 = vpack.c.b16 %v643, %v627
    %v1124 = vpack.c.b16 %v644, %v628
    %v1125 = vpack.c.b16 %v645, %v629
    %v1126 = vpack.c.b16 %v646, %v630
    %v1127 = vpack.c.b16 %v647, %v631
    %v1128 = vpack.c.b16 %v648, %v632
    %v1129 = vpack.c.b16 %v649, %v633
    %v1130 = vpack.c.b16 %v650, %v634
    %v1131 = vpack.c.b16 %v651, %v635
    %v1132 = vpack.c.b16 %v668, %v652
    %v1133 = vpack.c.b16 %v669, %v653
    %v1134 = vpack.c.b16 %v670, %v654
    %v1135 = vpack.c.b16 %v671, %v655
    %v1136 = vpack.c.b16 %v672, %v656
    %v1137 = vpack.c.b16 %v673, %v657
    %v1138 = vpack.c.b16 %v674, %v658
    %v1139 = vpack.c.b16 %v675, %v659
    %v1140 = vpack.c.b16 %v676, %v660
    %v1141 = vpack.c.b16 %v677, %v661
    %v1142 = vpack.c.b16 %v678, %v662
    %v1143 = vpack.c.b16 %v679, %v663
    %v1144 = vpack.c.b16 %v680, %v664
    %v1145 = vpack.c.b16 %v681, %v665
    %v1146 = vpack.c.b16 %v682, %v666
    %v1147 = vpack.c.b16 %v683, %v667
    %v1148 = vpack.c.b16 %v700, %v684
    %v1149 = vpack.c.b16 %v701, %v685
    %v1150 = vpack.c.b16 %v702, %v686
    %v1151 = vpack.c.b16 %v703, %v687
    %v1152 = vpack.c.b16 %v704, %v688
    %v1153 = vpack.c.b16 %v705, %v689
    %v1154 = vpack.c.b16 %v706, %v690
    %v1155 = vpack.c.b16 %v707, %v691
    %v1156 = vpack.c.b16 %v708, %v692
    %v1157 = vpack.c.b16 %v709, %v693
    %v1158 = vpack.c.b16 %v710, %v694
    %v1159 = vpack.c.b16 %v711, %v695
    %v1160 = vpack.c.b16 %v712, %v696
    %v1161 = vpack.c.b16 %v713, %v697
    %v1162 = vpack.c.b16 %v714, %v698
    %v1163 = vpack.c.b16 %v715, %v699
    %v1164 = vpack.c.b16 %v732, %v716
    %v1165 = vpack.c.b16 %v733, %v717
    %v1166 = vpack.c.b16 %v734, %v718
    %v1167 = vpack.c.b16 %v735, %v719
    %v1168 = vpack.c.b16 %v736, %v720
    %v1169 = vpack.c.b16 %v737, %v721
    %v1170 = vpack.c.b16 %v738, %v722
    %v1171 = vpack.c.b16 %v739, %v723
    %v1172 = vpack.c.b16 %v740, %v724
    %v1173 = vpack.c.b16 %v741, %v725
    %v1174 = vpack.c.b16 %v742, %v726
    %v1175 = vpack.c.b16 %v743, %v727
    %v1176 = vpack.c.b16 %v744, %v728
    %v1177 = vpack.c.b16 %v745, %v729
    %v1178 = vpack.c.b16 %v746, %v730
    %v1179 = vpack.c.b16 %v747, %v731
    %v1180 = vpack.c.b16 %v764, %v748
    %v1181 = vpack.c.b16 %v765, %v749
    %v1182 = vpack.c.b16 %v766, %v750
    %v1183 = vpack.c.b16 %v767, %v751
    %v1184 = vpack.c.b16 %v768, %v752
    %v1185 = vpack.c.b16 %v769, %v753
    %v1186 = vpack.c.b16 %v770, %v754
    %v1187 = vpack.c.b16 %v771, %v755
    %v1188 = vpack.c.b16 %v772, %v756
    %v1189 = vpack.c.b16 %v773, %v757
    %v1190 = vpack.c.b16 %v774, %v758
    %v1191 = vpack.c.b16 %v775, %v759
    %v1192 = vpack.c.b16 %v776, %v760
    %v1193 = vpack.c.b16 %v777, %v761
    %v1194 = vpack.c.b16 %v778, %v762
    %v1195 = vpack.c.b16 %v779, %v763
    %v1196 = vpack.c.b16 %v796, %v780
    %v1197 = vpack.c.b16 %v797, %v781
    %v1198 = vpack.c.b16 %v798, %v782
    %v1199 = vpack.c.b16 %v799, %v783
    %v1200 = vpack.c.b16 %v800, %v784
    %v1201 = vpack.c.b16 %v801, %v785
    %v1202 = vpack.c.b16 %v802, %v786
    %v1203 = vpack.c.b16 %v803, %v787
    %v1204 = vpack.c.b16 %v804, %v788
    %v1205 = vpack.c.b16 %v805, %v789
    %v1206 = vpack.c.b16 %v806, %v790
    %v1207 = vpack.c.b16 %v807, %v791
    %v1208 = vpack.c.b16 %v808, %v792
    %v1209 = vpack.c.b16 %v809, %v793
    %v1210 = vpack.c.b16 %v810, %v794
    %v1211 = vpack.c.b16 %v811, %v795
    %v1212 = vpack.c.b16 %v828, %v812
    %v1213 = vpack.c.b16 %v829, %v813
    %v1214 = vpack.c.b16 %v830, %v814
    %v1215 = vpack.c.b16 %v831, %v815
    %v1216 = vpack.c.b16 %v832, %v816
    %v1217 = vpack.c.b16 %v833, %v817
    %v1218 = vpack.c.b16 %v834, %v818
    %v1219 = vpack.c.b16 %v835, %v819
    %v1220 = vpack.c.b16 %v836, %v820
    %v1221 = vpack.c.b16 %v837, %v821
    %v1222 = vpack.c.b16 %v838, %v822
    %v1223 = vpack.c.b16 %v839, %v823
    %v1224 = vpack.c.b16 %v840, %v824
    %v1225 = vpack.c.b16 %v841, %v825
    %v1226 = vpack.c.b16 %v842, %v826
    %v1227 = vpack.c.b16 %v843, %v827
    %v1228 = vpack.c.b16 %v860, %v844
    %v1229 = vpack.c.b16 %v861, %v845
    %v1230 = vpack.c.b16 %v862, %v846
    %v1231 = vpack.c.b16 %v863, %v847
    %v1232 = vpack.c.b16 %v864, %v848
    %v1233 = vpack.c.b16 %v865, %v849
    %v1234 = vpack.c.b16 %v866, %v850
    %v1235 = vpack.c.b16 %v867, %v851
    %v1236 = vpack.c.b16 %v868, %v852
    %v1237 = vpack.c.b16 %v869, %v853
    %v1238 = vpack.c.b16 %v870, %v854
    %v1239 = vpack.c.b16 %v871, %v855
    %v1240 = vpack.c.b16 %v872, %v856
    %v1241 = vpack.c.b16 %v873, %v857
    %v1242 = vpack.c.b16 %v874, %v858
    %v1243 = vpack.c.b16 %v875, %v859
    %v1244 = vpack.c.b16 %v892, %v876
    %v1245 = vpack.c.b16 %v893, %v877
    %v1246 = vpack.c.b16 %v894, %v878
    %v1247 = vpack.c.b16 %v895, %v879
    %v1248 = vpack.c.b16 %v896, %v880
    %v1249 = vpack.c.b16 %v897, %v881
    %v1250 = vpack.c.b16 %v898, %v882
    %v1251 = vpack.c.b16 %v899, %v883
    %v1252 = vpack.c.b16 %v900, %v884
    %v1253 = vpack.c.b16 %v901, %v885
    %v1254 = vpack.c.b16 %v902, %v886
    %v1255 = vpack.c.b16 %v903, %v887
    %v1256 = vpack.c.b16 %v904, %v888
    %v1257 = vpack.c.b16 %v905, %v889
    %v1258 = vpack.c.b16 %v906, %v890
    %v1259 = vpack.c.b16 %v907, %v891
    %v1260 = vpack.c.b16 %v924, %v908
    %v1261 = vpack.c.b16 %v925, %v909
    %v1262 = vpack.c.b16 %v926, %v910
    %v1263 = vpack.c.b16 %v927, %v911
    %v1264 = vpack.c.b16 %v928, %v912
    %v1265 = vpack.c.b16 %v929, %v913
    %v1266 = vpack.c.b16 %v930, %v914
    %v1267 = vpack.c.b16 %v931, %v915
    %v1268 = vpack.c.b16 %v932, %v916
    %v1269 = vpack.c.b16 %v933, %v917
    %v1270 = vpack.c.b16 %v934, %v918
    %v1271 = vpack.c.b16 %v935, %v919
    %v1272 = vpack.c.b16 %v936, %v920
    %v1273 = vpack.c.b16 %v937, %v921
    %v1274 = vpack.c.b16 %v938, %v922
    %v1275 = vpack.c.b16 %v939, %v923
    %v1276 = vpack.c.b16 %v956, %v940
    %v1277 = vpack.c.b16 %v957, %v941
    %v1278 = vpack.c.b16 %v958, %v942
    %v1279 = vpack.c.b16 %v959, %v943
    %v1280 = vpack.c.b16 %v960, %v944
    %v1281 = vpack.c.b16 %v961, %v945
    %v1282 = vpack.c.b16 %v962, %v946
    %v1283 = vpack.c.b16 %v963, %v947
    %v1284 = vpack.c.b16 %v964, %v948
    %v1285 = vpack.c.b16 %v965, %v949
    %v1286 = vpack.c.b16 %v966, %v950
    %v1287 = vpack.c.b16 %v967, %v951
    %v1288 = vpack.c.b16 %v968, %v952
    %v1289 = vpack.c.b16 %v969, %v953
    %v1290 = vpack.c.b16 %v970, %v954
    %v1291 = vpack.c.b16 %v971, %v955
    %v1292 = vpack.c.b16 %v988, %v972
    %v1293 = vpack.c.b16 %v989, %v973
    %v1294 = vpack.c.b16 %v990, %v974
    %v1295 = vpack.c.b16 %v991, %v975
    %v1296 = vpack.c.b16 %v992, %v976
    %v1297 = vpack.c.b16 %v993, %v977
    %v1298 = vpack.c.b16 %v994, %v978
    %v1299 = vpack.c.b16 %v995, %v979
    %v1300 = vpack.c.b16 %v996, %v980
    %v1301 = vpack.c.b16 %v997, %v981
    %v1302 = vpack.c.b16 %v998, %v982
    %v1303 = vpack.c.b16 %v999, %v983
    %v1304 = vpack.c.b16 %v1000, %v984
    %v1305 = vpack.c.b16 %v1001, %v985
    %v1306 = vpack.c.b16 %v1002, %v986
    %v1307 = vpack.c.b16 %v1003, %v987
    %v1308 = vpack.c.b16 %v1020, %v1004
    %v1309 = vpack.c.b16 %v1021, %v1005
    %v1310 = vpack.c.b16 %v1022, %v1006
    %v1311 = vpack.c.b16 %v1023, %v1007
    %v1312 = vpack.c.b16 %v1024, %v1008
    %v1313 = vpack.c.b16 %v1025, %v1009
    %v1314 = vpack.c.b16 %v1026, %v1010
    %v1315 = vpack.c.b16 %v1027, %v1011
    %v1316 = vpack.c.b16 %v1028, %v1012
    %v1317 = vpack.c.b16 %v1029, %v1013
    %v1318 = vpack.c.b16 %v1030, %v1014
    %v1319 = vpack.c.b16 %v1031, %v1015
    %v1320 = vpack.c.b16 %v1032, %v1016
    %v1321 = vpack.c.b16 %v1033, %v1017
    %v1322 = vpack.c.b16 %v1034, %v1018
    %v1323 = vpack.c.b16 %v1035, %v1019
    %v1324 = vpack.c.b16 %v1052, %v1036
    %v1325 = vpack.c.b16 %v1053, %v1037
    %v1326 = vpack.c.b16 %v1054, %v1038
    %v1327 = vpack.c.b16 %v1055, %v1039
    %v1328 = vpack.c.b16 %v1056, %v1040
    %v1329 = vpack.c.b16 %v1057, %v1041
    %v1330 = vpack.c.b16 %v1058, %v1042
    %v1331 = vpack.c.b16 %v1059, %v1043
    %v1332 = vpack.c.b16 %v1060, %v1044
    %v1333 = vpack.c.b16 %v1061, %v1045
    %v1334 = vpack.c.b16 %v1062, %v1046
    %v1335 = vpack.c.b16 %v1063, %v1047
    %v1336 = vpack.c.b16 %v1064, %v1048
    %v1337 = vpack.c.b16 %v1065, %v1049
    %v1338 = vpack.c.b16 %v1066, %v1050
    %v1339 = vpack.c.b16 %v1067, %v1051
    %v1340 = vpack.c.b16 %v1084, %v1068
    %v1341 = vpack.c.b16 %v1085, %v1069
    %v1342 = vpack.c.b16 %v1086, %v1070
    %v1343 = vpack.c.b16 %v1087, %v1071
    %v1344 = vpack.c.b16 %v1088, %v1072
    %v1345 = vpack.c.b16 %v1089, %v1073
    %v1346 = vpack.c.b16 %v1090, %v1074
    %v1347 = vpack.c.b16 %v1091, %v1075
    %v1348 = vpack.c.b16 %v1092, %v1076
    %v1349 = vpack.c.b16 %v1093, %v1077
    %v1350 = vpack.c.b16 %v1094, %v1078
    %v1351 = vpack.c.b16 %v1095, %v1079
    %v1352 = vpack.c.b16 %v1096, %v1080
    %v1353 = vpack.c.b16 %v1097, %v1081
    %v1354 = vpack.c.b16 %v1098, %v1082
    %v1355 = vpack.c.b16 %v1099, %v1083
    %1612 = vmatprep.subr.bf16.mxu0 %v1213
    %1613 = vmatpush1.bf16.msra.mxu0 %v1212
    %1614 = vmatprep.subr.bf16.mxu0 %v1197
    %1615 = vmatpush1.bf16.msra.mxu0 %v1196
    %1616 = vmatprep.subr.bf16.mxu0 %v1181
    %1617 = vmatpush1.bf16.msra.mxu0 %v1180
    %1618 = vmatprep.subr.bf16.mxu0 %v1165
    %1619 = vmatpush1.bf16.msra.mxu0 %v1164
    %1620 = vmatprep.subr.bf16.mxu0 %v1149
    %1621 = vmatpush1.bf16.msra.mxu0 %v1148
    %1622 = vmatprep.subr.bf16.mxu0 %v1133
    %1623 = vmatpush1.bf16.msra.mxu0 %v1132
    %1624 = vmatprep.subr.bf16.mxu0 %v1117
    %1625 = vmatpush1.bf16.msra.mxu0 %v1116
    %1626 = vmatprep.subr.bf16.mxu0 %v1101
    %1627 = vmatpush1.bf16.msra.mxu0 %v1100
    %1628 = vmatprep.subr.bf16.mxu0 %v1341
    %1629 = vmatpush2.bf16.msra.mxu0 %v1340
    %1630 = vmatprep.subr.bf16.mxu0 %v1325
    %1631 = vmatpush2.bf16.msra.mxu0 %v1324
    %1632 = vmatprep.subr.bf16.mxu0 %v1309
    %1633 = vmatpush2.bf16.msra.mxu0 %v1308
    %1634 = vmatprep.subr.bf16.mxu0 %v1293
    %1635 = vmatpush2.bf16.msra.mxu0 %v1292
    %1636 = vmatprep.subr.bf16.mxu0 %v1277
    %1637 = vmatpush2.bf16.msra.mxu0 %v1276
    %1638 = vmatprep.subr.bf16.mxu0 %v1261
    %1639 = vmatpush2.bf16.msra.mxu0 %v1260
    %1640 = vmatprep.subr.bf16.mxu0 %v1245
    %1641 = vmatpush2.bf16.msra.mxu0 %v1244
    %1642 = vmatprep.subr.bf16.mxu0 %v1229
    %1643 = vmatpush2.bf16.msra.mxu0 %v1228
    %1644 = vmatprep.mubr.bf16.mxu0 %v329
    %1645 = vmatmul.mubr.bf16.gmra.mxu0 %v328
    %v1646 = vpop.f32.mrf.mxu0
    %v1647 = vadd.f32 0.0, %v1646
    %v1648 = vpop.f32.mrf.mxu0
    %v1649 = vadd.f32 0.0, %v1648
    %v1650 = vpop.f32.mrf.mxu0
    %v1651 = vpop.f32.mrf.mxu0
    %1652 = vdwg.mxu0
    %1653 = vmatprep.subr.bf16.mxu0 %v1215
    %1654 = vmatpush1.bf16.msra.mxu0 %v1214
    %1655 = vmatprep.subr.bf16.mxu0 %v1199
    %1656 = vmatpush1.bf16.msra.mxu0 %v1198
    %1657 = vmatprep.subr.bf16.mxu0 %v1183
    %1658 = vmatpush1.bf16.msra.mxu0 %v1182
    %1659 = vmatprep.subr.bf16.mxu0 %v1167
    %1660 = vmatpush1.bf16.msra.mxu0 %v1166
    %1661 = vmatprep.subr.bf16.mxu0 %v1151
    %1662 = vmatpush1.bf16.msra.mxu0 %v1150
    %1663 = vmatprep.subr.bf16.mxu0 %v1135
    %1664 = vmatpush1.bf16.msra.mxu0 %v1134
    %1665 = vmatprep.subr.bf16.mxu0 %v1119
    %1666 = vmatpush1.bf16.msra.mxu0 %v1118
    %1667 = vmatprep.subr.bf16.mxu0 %v1103
    %1668 = vmatpush1.bf16.msra.mxu0 %v1102
    %1669 = vmatprep.subr.bf16.mxu0 %v1343
    %1670 = vmatpush2.bf16.msra.mxu0 %v1342
    %1671 = vmatprep.subr.bf16.mxu0 %v1327
    %1672 = vmatpush2.bf16.msra.mxu0 %v1326
    %1673 = vmatprep.subr.bf16.mxu0 %v1311
    %1674 = vmatpush2.bf16.msra.mxu0 %v1310
    %1675 = vmatprep.subr.bf16.mxu0 %v1295
    %1676 = vmatpush2.bf16.msra.mxu0 %v1294
    %1677 = vmatprep.subr.bf16.mxu0 %v1279
    %1678 = vmatpush2.bf16.msra.mxu0 %v1278
    %1679 = vmatprep.subr.bf16.mxu0 %v1263
    %1680 = vmatpush2.bf16.msra.mxu0 %v1262
    %1681 = vmatprep.subr.bf16.mxu0 %v1247
    %1682 = vmatpush2.bf16.msra.mxu0 %v1246
    %1683 = vmatprep.subr.bf16.mxu0 %v1231
    %1684 = vmatpush2.bf16.msra.mxu0 %v1230
    %1685 = vmatprep.mubr.bf16.mxu0 %v329
    %1686 = vmatmul.mubr.bf16.gmra.mxu0 %v328
    %v1687 = vpop.f32.mrf.mxu0
    %v1688 = vadd.f32 0.0, %v1687
    %v1689 = vpop.f32.mrf.mxu0
    %v1690 = vadd.f32 0.0, %v1689
    %v1691 = vpop.f32.mrf.mxu0
    %v1692 = vpop.f32.mrf.mxu0
    %1693 = vdwg.mxu0
    %1694 = vmatprep.subr.bf16.mxu0 %v1217
    %1695 = vmatpush1.bf16.msra.mxu0 %v1216
    %1696 = vmatprep.subr.bf16.mxu0 %v1201
    %1697 = vmatpush1.bf16.msra.mxu0 %v1200
    %1698 = vmatprep.subr.bf16.mxu0 %v1185
    %1699 = vmatpush1.bf16.msra.mxu0 %v1184
    %1700 = vmatprep.subr.bf16.mxu0 %v1169
    %1701 = vmatpush1.bf16.msra.mxu0 %v1168
    %1702 = vmatprep.subr.bf16.mxu0 %v1153
    %1703 = vmatpush1.bf16.msra.mxu0 %v1152
    %1704 = vmatprep.subr.bf16.mxu0 %v1137
    %1705 = vmatpush1.bf16.msra.mxu0 %v1136
    %1706 = vmatprep.subr.bf16.mxu0 %v1121
    %1707 = vmatpush1.bf16.msra.mxu0 %v1120
    %1708 = vmatprep.subr.bf16.mxu0 %v1105
    %1709 = vmatpush1.bf16.msra.mxu0 %v1104
    %1710 = vmatprep.subr.bf16.mxu0 %v1345
    %1711 = vmatpush2.bf16.msra.mxu0 %v1344
    %1712 = vmatprep.subr.bf16.mxu0 %v1329
    %1713 = vmatpush2.bf16.msra.mxu0 %v1328
    %1714 = vmatprep.subr.bf16.mxu0 %v1313
    %1715 = vmatpush2.bf16.msra.mxu0 %v1312
    %1716 = vmatprep.subr.bf16.mxu0 %v1297
    %1717 = vmatpush2.bf16.msra.mxu0 %v1296
    %1718 = vmatprep.subr.bf16.mxu0 %v1281
    %1719 = vmatpush2.bf16.msra.mxu0 %v1280
    %1720 = vmatprep.subr.bf16.mxu0 %v1265
    %1721 = vmatpush2.bf16.msra.mxu0 %v1264
    %1722 = vmatprep.subr.bf16.mxu0 %v1249
    %1723 = vmatpush2.bf16.msra.mxu0 %v1248
    %1724 = vmatprep.subr.bf16.mxu0 %v1233
    %1725 = vmatpush2.bf16.msra.mxu0 %v1232
    %1726 = vmatprep.mubr.bf16.mxu0 %v329
    %1727 = vmatmul.mubr.bf16.gmra.mxu0 %v328
    %v1728 = vpop.f32.mrf.mxu0
    %v1729 = vadd.f32 0.0, %v1728
    %v1730 = vpop.f32.mrf.mxu0
    %v1731 = vadd.f32 0.0, %v1730
    %v1732 = vpop.f32.mrf.mxu0
    %v1733 = vpop.f32.mrf.mxu0
    %1734 = vdwg.mxu0
    %1735 = vmatprep.subr.bf16.mxu0 %v1219
    %1736 = vmatpush1.bf16.msra.mxu0 %v1218
    %1737 = vmatprep.subr.bf16.mxu0 %v1203
    %1738 = vmatpush1.bf16.msra.mxu0 %v1202
    %1739 = vmatprep.subr.bf16.mxu0 %v1187
    %1740 = vmatpush1.bf16.msra.mxu0 %v1186
    %1741 = vmatprep.subr.bf16.mxu0 %v1171
    %1742 = vmatpush1.bf16.msra.mxu0 %v1170
    %1743 = vmatprep.subr.bf16.mxu0 %v1155
    %1744 = vmatpush1.bf16.msra.mxu0 %v1154
    %1745 = vmatprep.subr.bf16.mxu0 %v1139
    %1746 = vmatpush1.bf16.msra.mxu0 %v1138
    %1747 = vmatprep.subr.bf16.mxu0 %v1123
    %1748 = vmatpush1.bf16.msra.mxu0 %v1122
    %1749 = vmatprep.subr.bf16.mxu0 %v1107
    %1750 = vmatpush1.bf16.msra.mxu0 %v1106
    %1751 = vmatprep.subr.bf16.mxu0 %v1347
    %1752 = vmatpush2.bf16.msra.mxu0 %v1346
    %1753 = vmatprep.subr.bf16.mxu0 %v1331
    %1754 = vmatpush2.bf16.msra.mxu0 %v1330
    %1755 = vmatprep.subr.bf16.mxu0 %v1315
    %1756 = vmatpush2.bf16.msra.mxu0 %v1314
    %1757 = vmatprep.subr.bf16.mxu0 %v1299
    %1758 = vmatpush2.bf16.msra.mxu0 %v1298
    %1759 = vmatprep.subr.bf16.mxu0 %v1283
    %1760 = vmatpush2.bf16.msra.mxu0 %v1282
    %1761 = vmatprep.subr.bf16.mxu0 %v1267
    %1762 = vmatpush2.bf16.msra.mxu0 %v1266
    %1763 = vmatprep.subr.bf16.mxu0 %v1251
    %1764 = vmatpush2.bf16.msra.mxu0 %v1250
    %1765 = vmatprep.subr.bf16.mxu0 %v1235
    %1766 = vmatpush2.bf16.msra.mxu0 %v1234
    %1767 = vmatprep.mubr.bf16.mxu0 %v329
    %1768 = vmatmul.mubr.bf16.gmra.mxu0 %v328
    %v1769 = vpop.f32.mrf.mxu0
    %v1770 = vadd.f32 0.0, %v1769
    %v1771 = vpop.f32.mrf.mxu0
    %v1772 = vadd.f32 0.0, %v1771
    %v1773 = vpop.f32.mrf.mxu0
    %v1774 = vpop.f32.mrf.mxu0
    %1775 = vdwg.mxu0
    %1776 = vmatprep.subr.bf16.mxu0 %v1221
    %1777 = vmatpush1.bf16.msra.mxu0 %v1220
    %1778 = vmatprep.subr.bf16.mxu0 %v1205
    %1779 = vmatpush1.bf16.msra.mxu0 %v1204
    %1780 = vmatprep.subr.bf16.mxu0 %v1189
    %1781 = vmatpush1.bf16.msra.mxu0 %v1188
    %1782 = vmatprep.subr.bf16.mxu0 %v1173
    %1783 = vmatpush1.bf16.msra.mxu0 %v1172
    %1784 = vmatprep.subr.bf16.mxu0 %v1157
    %1785 = vmatpush1.bf16.msra.mxu0 %v1156
    %1786 = vmatprep.subr.bf16.mxu0 %v1141
    %1787 = vmatpush1.bf16.msra.mxu0 %v1140
    %1788 = vmatprep.subr.bf16.mxu0 %v1125
    %1789 = vmatpush1.bf16.msra.mxu0 %v1124
    %1790 = vmatprep.subr.bf16.mxu0 %v1109
    %1791 = vmatpush1.bf16.msra.mxu0 %v1108
    %1792 = vmatprep.subr.bf16.mxu0 %v1349
    %1793 = vmatpush2.bf16.msra.mxu0 %v1348
    %1794 = vmatprep.subr.bf16.mxu0 %v1333
    %1795 = vmatpush2.bf16.msra.mxu0 %v1332
    %1796 = vmatprep.subr.bf16.mxu0 %v1317
    %1797 = vmatpush2.bf16.msra.mxu0 %v1316
    %1798 = vmatprep.subr.bf16.mxu0 %v1301
    %1799 = vmatpush2.bf16.msra.mxu0 %v1300
    %1800 = vmatprep.subr.bf16.mxu0 %v1285
    %1801 = vmatpush2.bf16.msra.mxu0 %v1284
    %1802 = vmatprep.subr.bf16.mxu0 %v1269
    %1803 = vmatpush2.bf16.msra.mxu0 %v1268
    %1804 = vmatprep.subr.bf16.mxu0 %v1253
    %1805 = vmatpush2.bf16.msra.mxu0 %v1252
    %1806 = vmatprep.subr.bf16.mxu0 %v1237
    %1807 = vmatpush2.bf16.msra.mxu0 %v1236
    %1808 = vmatprep.mubr.bf16.mxu0 %v329
    %1809 = vmatmul.mubr.bf16.gmra.mxu0 %v328
    %v1810 = vpop.f32.mrf.mxu0
    %v1811 = vadd.f32 0.0, %v1810
    %v1812 = vpop.f32.mrf.mxu0
    %v1813 = vadd.f32 0.0, %v1812
    %v1814 = vpop.f32.mrf.mxu0
    %v1815 = vpop.f32.mrf.mxu0
    %1816 = vdwg.mxu0
    %1817 = vmatprep.subr.bf16.mxu0 %v1223
    %1818 = vmatpush1.bf16.msra.mxu0 %v1222
    %1819 = vmatprep.subr.bf16.mxu0 %v1207
    %1820 = vmatpush1.bf16.msra.mxu0 %v1206
    %1821 = vmatprep.subr.bf16.mxu0 %v1191
    %1822 = vmatpush1.bf16.msra.mxu0 %v1190
    %1823 = vmatprep.subr.bf16.mxu0 %v1175
    %1824 = vmatpush1.bf16.msra.mxu0 %v1174
    %1825 = vmatprep.subr.bf16.mxu0 %v1159
    %1826 = vmatpush1.bf16.msra.mxu0 %v1158
    %1827 = vmatprep.subr.bf16.mxu0 %v1143
    %1828 = vmatpush1.bf16.msra.mxu0 %v1142
    %1829 = vmatprep.subr.bf16.mxu0 %v1127
    %1830 = vmatpush1.bf16.msra.mxu0 %v1126
    %1831 = vmatprep.subr.bf16.mxu0 %v1111
    %1832 = vmatpush1.bf16.msra.mxu0 %v1110
    %1833 = vmatprep.subr.bf16.mxu0 %v1351
    %1834 = vmatpush2.bf16.msra.mxu0 %v1350
    %1835 = vmatprep.subr.bf16.mxu0 %v1335
    %1836 = vmatpush2.bf16.msra.mxu0 %v1334
    %1837 = vmatprep.subr.bf16.mxu0 %v1319
    %1838 = vmatpush2.bf16.msra.mxu0 %v1318
    %1839 = vmatprep.subr.bf16.mxu0 %v1303
    %1840 = vmatpush2.bf16.msra.mxu0 %v1302
    %1841 = vmatprep.subr.bf16.mxu0 %v1287
    %1842 = vmatpush2.bf16.msra.mxu0 %v1286
    %1843 = vmatprep.subr.bf16.mxu0 %v1271
    %1844 = vmatpush2.bf16.msra.mxu0 %v1270
    %1845 = vmatprep.subr.bf16.mxu0 %v1255
    %1846 = vmatpush2.bf16.msra.mxu0 %v1254
    %1847 = vmatprep.subr.bf16.mxu0 %v1239
    %1848 = vmatpush2.bf16.msra.mxu0 %v1238
    %1849 = vmatprep.mubr.bf16.mxu0 %v329
    %1850 = vmatmul.mubr.bf16.gmra.mxu0 %v328
    %v1851 = vpop.f32.mrf.mxu0
    %v1852 = vadd.f32 0.0, %v1851
    %v1853 = vpop.f32.mrf.mxu0
    %v1854 = vadd.f32 0.0, %v1853
    %v1855 = vpop.f32.mrf.mxu0
    %v1856 = vpop.f32.mrf.mxu0
    %1857 = vdwg.mxu0
    %1858 = vmatprep.subr.bf16.mxu0 %v1225
    %1859 = vmatpush1.bf16.msra.mxu0 %v1224
    %1860 = vmatprep.subr.bf16.mxu0 %v1209
    %1861 = vmatpush1.bf16.msra.mxu0 %v1208
    %1862 = vmatprep.subr.bf16.mxu0 %v1193
    %1863 = vmatpush1.bf16.msra.mxu0 %v1192
    %1864 = vmatprep.subr.bf16.mxu0 %v1177
    %1865 = vmatpush1.bf16.msra.mxu0 %v1176
    %1866 = vmatprep.subr.bf16.mxu0 %v1161
    %1867 = vmatpush1.bf16.msra.mxu0 %v1160
    %1868 = vmatprep.subr.bf16.mxu0 %v1145
    %1869 = vmatpush1.bf16.msra.mxu0 %v1144
    %1870 = vmatprep.subr.bf16.mxu0 %v1129
    %1871 = vmatpush1.bf16.msra.mxu0 %v1128
    %1872 = vmatprep.subr.bf16.mxu0 %v1113
    %1873 = vmatpush1.bf16.msra.mxu0 %v1112
    %1874 = vmatprep.subr.bf16.mxu0 %v1353
    %1875 = vmatpush2.bf16.msra.mxu0 %v1352
    %1876 = vmatprep.subr.bf16.mxu0 %v1337
    %1877 = vmatpush2.bf16.msra.mxu0 %v1336
    %1878 = vmatprep.subr.bf16.mxu0 %v1321
    %1879 = vmatpush2.bf16.msra.mxu0 %v1320
    %1880 = vmatprep.subr.bf16.mxu0 %v1305
    %1881 = vmatpush2.bf16.msra.mxu0 %v1304
    %1882 = vmatprep.subr.bf16.mxu0 %v1289
    %1883 = vmatpush2.bf16.msra.mxu0 %v1288
    %1884 = vmatprep.subr.bf16.mxu0 %v1273
    %1885 = vmatpush2.bf16.msra.mxu0 %v1272
    %1886 = vmatprep.subr.bf16.mxu0 %v1257
    %1887 = vmatpush2.bf16.msra.mxu0 %v1256
    %1888 = vmatprep.subr.bf16.mxu0 %v1241
    %1889 = vmatpush2.bf16.msra.mxu0 %v1240
    %1890 = vmatprep.mubr.bf16.mxu0 %v329
    %1891 = vmatmul.mubr.bf16.gmra.mxu0 %v328
    %v1892 = vpop.f32.mrf.mxu0
    %v1893 = vadd.f32 0.0, %v1892
    %v1894 = vpop.f32.mrf.mxu0
    %v1895 = vadd.f32 0.0, %v1894
    %v1896 = vpop.f32.mrf.mxu0
    %v1897 = vpop.f32.mrf.mxu0
    %1898 = vdwg.mxu0
    %1899 = vmatprep.subr.bf16.mxu0 %v1227
    %1900 = vmatpush1.bf16.msra.mxu0 %v1226
    %1901 = vmatprep.subr.bf16.mxu0 %v1211
    %1902 = vmatpush1.bf16.msra.mxu0 %v1210
    %1903 = vmatprep.subr.bf16.mxu0 %v1195
    %1904 = vmatpush1.bf16.msra.mxu0 %v1194
    %1905 = vmatprep.subr.bf16.mxu0 %v1179
    %1906 = vmatpush1.bf16.msra.mxu0 %v1178
    %1907 = vmatprep.subr.bf16.mxu0 %v1163
    %1908 = vmatpush1.bf16.msra.mxu0 %v1162
    %1909 = vmatprep.subr.bf16.mxu0 %v1147
    %1910 = vmatpush1.bf16.msra.mxu0 %v1146
    %1911 = vmatprep.subr.bf16.mxu0 %v1131
    %1912 = vmatpush1.bf16.msra.mxu0 %v1130
    %1913 = vmatprep.subr.bf16.mxu0 %v1115
    %1914 = vmatpush1.bf16.msra.mxu0 %v1114
    %1915 = vmatprep.subr.bf16.mxu0 %v1355
    %1916 = vmatpush2.bf16.msra.mxu0 %v1354
    %1917 = vmatprep.subr.bf16.mxu0 %v1339
    %1918 = vmatpush2.bf16.msra.mxu0 %v1338
    %1919 = vmatprep.subr.bf16.mxu0 %v1323
    %1920 = vmatpush2.bf16.msra.mxu0 %v1322
    %1921 = vmatprep.subr.bf16.mxu0 %v1307
    %1922 = vmatpush2.bf16.msra.mxu0 %v1306
    %1923 = vmatprep.subr.bf16.mxu0 %v1291
    %1924 = vmatpush2.bf16.msra.mxu0 %v1290
    %1925 = vmatprep.subr.bf16.mxu0 %v1275
    %1926 = vmatpush2.bf16.msra.mxu0 %v1274
    %1927 = vmatprep.subr.bf16.mxu0 %v1259
    %1928 = vmatpush2.bf16.msra.mxu0 %v1258
    %1929 = vmatprep.subr.bf16.mxu0 %v1243
    %1930 = vmatpush2.bf16.msra.mxu0 %v1242
    %1931 = vmatprep.mubr.bf16.mxu0 %v329
    %1932 = vmatmul.mubr.bf16.gmra.mxu0 %v328
    %v1933 = vpop.f32.mrf.mxu0
    %v1934 = vadd.f32 0.0, %v1933
    %v1935 = vpop.f32.mrf.mxu0
    %v1936 = vadd.f32 0.0, %v1935
    %v1937 = vpop.f32.mrf.mxu0
    %v1938 = vpop.f32.mrf.mxu0
    %1939 = vdwg.mxu0
    %v1940 = vmax.f32 %v1647, %v1729
    %v1941 = vmax.f32 %v1649, %v1731
    %v1942 = vmax.f32 %v1688, %v1770
    %v1943 = vmax.f32 %v1690, %v1772
    %v1944 = vmax.f32 %v1811, %v1893
    %v1945 = vmax.f32 %v1813, %v1895
    %v1946 = vmax.f32 %v1852, %v1934
    %v1947 = vmax.f32 %v1854, %v1936
    %v1948 = vmax.f32 %v1940, %v1944
    %v1949 = vmax.f32 %v1941, %v1945
    %v1950 = vmax.f32 %v1942, %v1946
    %v1951 = vmax.f32 %v1943, %v1947
    %v1952 = vld [vmem:[%s2] sm:$0xf]
    %v1954 = vlaneseq
    %v1955 = vshrl.u32 %v1954, 7
    %v1956 = vsub.s32 0, %v1955
    %v1957 = vrot.slane %v1952, %v1956
    %v1958 = vlaneseq
    %v1959 = vshrl.u32 %v1958, 7
    %v1960 = vsub.s32 1, %v1959
    %v1961 = vrot.slane %v1952, %v1960
    %v1962 = vlaneseq
    %v1963 = vshrl.u32 %v1962, 7
    %v1964 = vsub.s32 2, %v1963
    %v1965 = vrot.slane %v1952, %v1964
    %v1966 = vlaneseq
    %v1967 = vshrl.u32 %v1966, 7
    %v1968 = vsub.s32 3, %v1967
    %v1969 = vrot.slane %v1952, %v1968
    %v1974 = vadd.f32 %v1948, %v1957
    %v1975 = vadd.f32 %v1949, %v1961
    %v1976 = vadd.f32 %v1950, %v1965
    %v1977 = vadd.f32 %v1951, %v1969
    %v1978 = vmax.f32 %v1974, 0.0
    %v1979 = vmax.f32 %v1975, 0.0
    %v1980 = vmax.f32 %v1976, 0.0
    %v1981 = vmax.f32 %v1977, 0.0
    %v1982 = vpack.c.bf16 %v1978, %v1978
    %v1983 = vpack.c.bf16 %v1979, %v1979
    %v1984 = vpack.c.bf16 %v1980, %v1980
    %v1985 = vpack.c.bf16 %v1981, %v1981
    %v1986 = vld [vmem:[#allocation4] sm:$0xff]
    %v1987 = vld [vmem:[#allocation4 + $0x8] sm:$0xff]
    %v1988 = vld [vmem:[#allocation4 + $0x10] sm:$0xff]
    %v1989 = vld [vmem:[#allocation4 + $0x18] sm:$0xff]
    %v1990 = vld [vmem:[#allocation4 + $0x20] sm:$0xff]
    %v1991 = vld [vmem:[#allocation4 + $0x28] sm:$0xff]
    %v1992 = vld [vmem:[#allocation4 + $0x30] sm:$0xff]
    %v1993 = vld [vmem:[#allocation4 + $0x38] sm:$0xff]
    %v1994 = vld [vmem:[#allocation4 + $0x40] sm:$0xff]
    %v1995 = vld [vmem:[#allocation4 + $0x48] sm:$0xff]
    %v1996 = vld [vmem:[#allocation4 + $0x50] sm:$0xff]
    %v1997 = vld [vmem:[#allocation4 + $0x58] sm:$0xff]
    %v1998 = vld [vmem:[#allocation4 + $0x60] sm:$0xff]
    %v1999 = vld [vmem:[#allocation4 + $0x68] sm:$0xff]
    %v2000 = vld [vmem:[#allocation4 + $0x70] sm:$0xff]
    %v2001 = vld [vmem:[#allocation4 + $0x78] sm:$0xff]
    %v2002 = vld [vmem:[#allocation4 + $0x80] sm:$0xff]
    %v2003 = vld [vmem:[#allocation4 + $0x88] sm:$0xff]
    %v2004 = vld [vmem:[#allocation4 + $0x90] sm:$0xff]
    %v2005 = vld [vmem:[#allocation4 + $0x98] sm:$0xff]
    %v2006 = vld [vmem:[#allocation4 + $0xa0] sm:$0xff]
    %v2007 = vld [vmem:[#allocation4 + $0xa8] sm:$0xff]
    %v2008 = vld [vmem:[#allocation4 + $0xb0] sm:$0xff]
    %v2009 = vld [vmem:[#allocation4 + $0xb8] sm:$0xff]
    %v2010 = vld [vmem:[#allocation4 + $0xc0] sm:$0xff]
    %v2011 = vld [vmem:[#allocation4 + $0xc8] sm:$0xff]
    %v2012 = vld [vmem:[#allocation4 + $0xd0] sm:$0xff]
    %v2013 = vld [vmem:[#allocation4 + $0xd8] sm:$0xff]
    %v2014 = vld [vmem:[#allocation4 + $0xe0] sm:$0xff]
    %v2015 = vld [vmem:[#allocation4 + $0xe8] sm:$0xff]
    %v2016 = vld [vmem:[#allocation4 + $0xf0] sm:$0xff]
    %v2017 = vld [vmem:[#allocation4 + $0xf8] sm:$0xff]
    %v2018 = vld [vmem:[#allocation4 + $0x100] sm:$0xff]
    %v2019 = vld [vmem:[#allocation4 + $0x108] sm:$0xff]
    %v2020 = vld [vmem:[#allocation4 + $0x110] sm:$0xff]
    %v2021 = vld [vmem:[#allocation4 + $0x118] sm:$0xff]
    %v2022 = vld [vmem:[#allocation4 + $0x120] sm:$0xff]
    %v2023 = vld [vmem:[#allocation4 + $0x128] sm:$0xff]
    %v2024 = vld [vmem:[#allocation4 + $0x130] sm:$0xff]
    %v2025 = vld [vmem:[#allocation4 + $0x138] sm:$0xff]
    %v2026 = vld [vmem:[#allocation4 + $0x140] sm:$0xff]
    %v2027 = vld [vmem:[#allocation4 + $0x148] sm:$0xff]
    %v2028 = vld [vmem:[#allocation4 + $0x150] sm:$0xff]
    %v2029 = vld [vmem:[#allocation4 + $0x158] sm:$0xff]
    %v2030 = vld [vmem:[#allocation4 + $0x160] sm:$0xff]
    %v2031 = vld [vmem:[#allocation4 + $0x168] sm:$0xff]
    %v2032 = vld [vmem:[#allocation4 + $0x170] sm:$0xff]
    %v2033 = vld [vmem:[#allocation4 + $0x178] sm:$0xff]
    %v2034 = vld [vmem:[#allocation4 + $0x180] sm:$0xff]
    %v2035 = vld [vmem:[#allocation4 + $0x188] sm:$0xff]
    %v2036 = vld [vmem:[#allocation4 + $0x190] sm:$0xff]
    %v2037 = vld [vmem:[#allocation4 + $0x198] sm:$0xff]
    %v2038 = vld [vmem:[#allocation4 + $0x1a0] sm:$0xff]
    %v2039 = vld [vmem:[#allocation4 + $0x1a8] sm:$0xff]
    %v2040 = vld [vmem:[#allocation4 + $0x1b0] sm:$0xff]
    %v2041 = vld [vmem:[#allocation4 + $0x1b8] sm:$0xff]
    %v2042 = vld [vmem:[#allocation4 + $0x1c0] sm:$0xff]
    %v2043 = vld [vmem:[#allocation4 + $0x1c8] sm:$0xff]
    %v2044 = vld [vmem:[#allocation4 + $0x1d0] sm:$0xff]
    %v2045 = vld [vmem:[#allocation4 + $0x1d8] sm:$0xff]
    %v2046 = vld [vmem:[#allocation4 + $0x1e0] sm:$0xff]
    %v2047 = vld [vmem:[#allocation4 + $0x1e8] sm:$0xff]
    %v2048 = vld [vmem:[#allocation4 + $0x1f0] sm:$0xff]
    %v2049 = vld [vmem:[#allocation4 + $0x1f8] sm:$0xff]
    %v2050 = vld [vmem:[%s4] sm:$0x3]
    %v2052 = vlaneseq
    %v2053 = vshrl.u32 %v2052, 7
    %v2054 = vsub.s32 0, %v2053
    %v2055 = vrot.slane %v2050, %v2054
    %v2056 = vlaneseq
    %v2057 = vshrl.u32 %v2056, 7
    %v2058 = vsub.s32 1, %v2057
    %v2059 = vrot.slane %v2050, %v2058
    %v2126 = vunpack.c.l.b16 %v1986
    %v2127 = vunpack.c.h.b16 %v1986
    %v2128 = vunpack.c.l.b16 %v1987
    %v2129 = vunpack.c.h.b16 %v1987
    %v2130 = vunpack.c.l.b16 %v1988
    %v2131 = vunpack.c.h.b16 %v1988
    %v2132 = vunpack.c.l.b16 %v1989
    %v2133 = vunpack.c.h.b16 %v1989
    %v2134 = vunpack.c.l.b16 %v1990
    %v2135 = vunpack.c.h.b16 %v1990
    %v2136 = vunpack.c.l.b16 %v1991
    %v2137 = vunpack.c.h.b16 %v1991
    %v2138 = vunpack.c.l.b16 %v1992
    %v2139 = vunpack.c.h.b16 %v1992
    %v2140 = vunpack.c.l.b16 %v1993
    %v2141 = vunpack.c.h.b16 %v1993
    %v2142 = vunpack.c.l.b16 %v1994
    %v2143 = vunpack.c.h.b16 %v1994
    %v2144 = vunpack.c.l.b16 %v1995
    %v2145 = vunpack.c.h.b16 %v1995
    %v2146 = vunpack.c.l.b16 %v1996
    %v2147 = vunpack.c.h.b16 %v1996
    %v2148 = vunpack.c.l.b16 %v1997
    %v2149 = vunpack.c.h.b16 %v1997
    %v2150 = vunpack.c.l.b16 %v1998
    %v2151 = vunpack.c.h.b16 %v1998
    %v2152 = vunpack.c.l.b16 %v1999
    %v2153 = vunpack.c.h.b16 %v1999
    %v2154 = vunpack.c.l.b16 %v2000
    %v2155 = vunpack.c.h.b16 %v2000
    %v2156 = vunpack.c.l.b16 %v2001
    %v2157 = vunpack.c.h.b16 %v2001
    %v2158 = vunpack.c.l.b16 %v2002
    %v2159 = vunpack.c.h.b16 %v2002
    %v2160 = vunpack.c.l.b16 %v2003
    %v2161 = vunpack.c.h.b16 %v2003
    %v2162 = vunpack.c.l.b16 %v2004
    %v2163 = vunpack.c.h.b16 %v2004
    %v2164 = vunpack.c.l.b16 %v2005
    %v2165 = vunpack.c.h.b16 %v2005
    %v2166 = vunpack.c.l.b16 %v2006
    %v2167 = vunpack.c.h.b16 %v2006
    %v2168 = vunpack.c.l.b16 %v2007
    %v2169 = vunpack.c.h.b16 %v2007
    %v2170 = vunpack.c.l.b16 %v2008
    %v2171 = vunpack.c.h.b16 %v2008
    %v2172 = vunpack.c.l.b16 %v2009
    %v2173 = vunpack.c.h.b16 %v2009
    %v2174 = vunpack.c.l.b16 %v2010
    %v2175 = vunpack.c.h.b16 %v2010
    %v2176 = vunpack.c.l.b16 %v2011
    %v2177 = vunpack.c.h.b16 %v2011
    %v2178 = vunpack.c.l.b16 %v2012
    %v2179 = vunpack.c.h.b16 %v2012
    %v2180 = vunpack.c.l.b16 %v2013
    %v2181 = vunpack.c.h.b16 %v2013
    %v2182 = vunpack.c.l.b16 %v2014
    %v2183 = vunpack.c.h.b16 %v2014
    %v2184 = vunpack.c.l.b16 %v2015
    %v2185 = vunpack.c.h.b16 %v2015
    %v2186 = vunpack.c.l.b16 %v2016
    %v2187 = vunpack.c.h.b16 %v2016
    %v2188 = vunpack.c.l.b16 %v2017
    %v2189 = vunpack.c.h.b16 %v2017
    %v2190 = vunpack.c.l.b16 %v2018
    %v2191 = vunpack.c.h.b16 %v2018
    %v2192 = vunpack.c.l.b16 %v2019
    %v2193 = vunpack.c.h.b16 %v2019
    %v2194 = vunpack.c.l.b16 %v2020
    %v2195 = vunpack.c.h.b16 %v2020
    %v2196 = vunpack.c.l.b16 %v2021
    %v2197 = vunpack.c.h.b16 %v2021
    %v2198 = vunpack.c.l.b16 %v2022
    %v2199 = vunpack.c.h.b16 %v2022
    %v2200 = vunpack.c.l.b16 %v2023
    %v2201 = vunpack.c.h.b16 %v2023
    %v2202 = vunpack.c.l.b16 %v2024
    %v2203 = vunpack.c.h.b16 %v2024
    %v2204 = vunpack.c.l.b16 %v2025
    %v2205 = vunpack.c.h.b16 %v2025
    %v2206 = vunpack.c.l.b16 %v2026
    %v2207 = vunpack.c.h.b16 %v2026
    %v2208 = vunpack.c.l.b16 %v2027
    %v2209 = vunpack.c.h.b16 %v2027
    %v2210 = vunpack.c.l.b16 %v2028
    %v2211 = vunpack.c.h.b16 %v2028
    %v2212 = vunpack.c.l.b16 %v2029
    %v2213 = vunpack.c.h.b16 %v2029
    %v2214 = vunpack.c.l.b16 %v2030
    %v2215 = vunpack.c.h.b16 %v2030
    %v2216 = vunpack.c.l.b16 %v2031
    %v2217 = vunpack.c.h.b16 %v2031
    %v2218 = vunpack.c.l.b16 %v2032
    %v2219 = vunpack.c.h.b16 %v2032
    %v2220 = vunpack.c.l.b16 %v2033
    %v2221 = vunpack.c.h.b16 %v2033
    %v2222 = vunpack.c.l.b16 %v2034
    %v2223 = vunpack.c.h.b16 %v2034
    %v2224 = vunpack.c.l.b16 %v2035
    %v2225 = vunpack.c.h.b16 %v2035
    %v2226 = vunpack.c.l.b16 %v2036
    %v2227 = vunpack.c.h.b16 %v2036
    %v2228 = vunpack.c.l.b16 %v2037
    %v2229 = vunpack.c.h.b16 %v2037
    %v2230 = vunpack.c.l.b16 %v2038
    %v2231 = vunpack.c.h.b16 %v2038
    %v2232 = vunpack.c.l.b16 %v2039
    %v2233 = vunpack.c.h.b16 %v2039
    %v2234 = vunpack.c.l.b16 %v2040
    %v2235 = vunpack.c.h.b16 %v2040
    %v2236 = vunpack.c.l.b16 %v2041
    %v2237 = vunpack.c.h.b16 %v2041
    %v2238 = vunpack.c.l.b16 %v2042
    %v2239 = vunpack.c.h.b16 %v2042
    %v2240 = vunpack.c.l.b16 %v2043
    %v2241 = vunpack.c.h.b16 %v2043
    %v2242 = vunpack.c.l.b16 %v2044
    %v2243 = vunpack.c.h.b16 %v2044
    %v2244 = vunpack.c.l.b16 %v2045
    %v2245 = vunpack.c.h.b16 %v2045
    %v2246 = vunpack.c.l.b16 %v2046
    %v2247 = vunpack.c.h.b16 %v2046
    %v2248 = vunpack.c.l.b16 %v2047
    %v2249 = vunpack.c.h.b16 %v2047
    %v2250 = vunpack.c.l.b16 %v2048
    %v2251 = vunpack.c.h.b16 %v2048
    %v2252 = vunpack.c.l.b16 %v2049
    %v2253 = vunpack.c.h.b16 %v2049
    %v2254 = vpack.c.b16 %v2128, %v2126
    %v2255 = vpack.c.b16 %v2129, %v2127
    %v2256 = vpack.c.b16 %v2132, %v2130
    %v2257 = vpack.c.b16 %v2133, %v2131
    %v2258 = vpack.c.b16 %v2136, %v2134
    %v2259 = vpack.c.b16 %v2137, %v2135
    %v2260 = vpack.c.b16 %v2140, %v2138
    %v2261 = vpack.c.b16 %v2141, %v2139
    %v2262 = vpack.c.b16 %v2144, %v2142
    %v2263 = vpack.c.b16 %v2145, %v2143
    %v2264 = vpack.c.b16 %v2148, %v2146
    %v2265 = vpack.c.b16 %v2149, %v2147
    %v2266 = vpack.c.b16 %v2152, %v2150
    %v2267 = vpack.c.b16 %v2153, %v2151
    %v2268 = vpack.c.b16 %v2156, %v2154
    %v2269 = vpack.c.b16 %v2157, %v2155
    %v2270 = vpack.c.b16 %v2160, %v2158
    %v2271 = vpack.c.b16 %v2161, %v2159
    %v2272 = vpack.c.b16 %v2164, %v2162
    %v2273 = vpack.c.b16 %v2165, %v2163
    %v2274 = vpack.c.b16 %v2168, %v2166
    %v2275 = vpack.c.b16 %v2169, %v2167
    %v2276 = vpack.c.b16 %v2172, %v2170
    %v2277 = vpack.c.b16 %v2173, %v2171
    %v2278 = vpack.c.b16 %v2176, %v2174
    %v2279 = vpack.c.b16 %v2177, %v2175
    %v2280 = vpack.c.b16 %v2180, %v2178
    %v2281 = vpack.c.b16 %v2181, %v2179
    %v2282 = vpack.c.b16 %v2184, %v2182
    %v2283 = vpack.c.b16 %v2185, %v2183
    %v2284 = vpack.c.b16 %v2188, %v2186
    %v2285 = vpack.c.b16 %v2189, %v2187
    %v2286 = vpack.c.b16 %v2192, %v2190
    %v2287 = vpack.c.b16 %v2193, %v2191
    %v2288 = vpack.c.b16 %v2196, %v2194
    %v2289 = vpack.c.b16 %v2197, %v2195
    %v2290 = vpack.c.b16 %v2200, %v2198
    %v2291 = vpack.c.b16 %v2201, %v2199
    %v2292 = vpack.c.b16 %v2204, %v2202
    %v2293 = vpack.c.b16 %v2205, %v2203
    %v2294 = vpack.c.b16 %v2208, %v2206
    %v2295 = vpack.c.b16 %v2209, %v2207
    %v2296 = vpack.c.b16 %v2212, %v2210
    %v2297 = vpack.c.b16 %v2213, %v2211
    %v2298 = vpack.c.b16 %v2216, %v2214
    %v2299 = vpack.c.b16 %v2217, %v2215
    %v2300 = vpack.c.b16 %v2220, %v2218
    %v2301 = vpack.c.b16 %v2221, %v2219
    %v2302 = vpack.c.b16 %v2224, %v2222
    %v2303 = vpack.c.b16 %v2225, %v2223
    %v2304 = vpack.c.b16 %v2228, %v2226
    %v2305 = vpack.c.b16 %v2229, %v2227
    %v2306 = vpack.c.b16 %v2232, %v2230
    %v2307 = vpack.c.b16 %v2233, %v2231
    %v2308 = vpack.c.b16 %v2236, %v2234
    %v2309 = vpack.c.b16 %v2237, %v2235
    %v2310 = vpack.c.b16 %v2240, %v2238
    %v2311 = vpack.c.b16 %v2241, %v2239
    %v2312 = vpack.c.b16 %v2244, %v2242
    %v2313 = vpack.c.b16 %v2245, %v2243
    %v2314 = vpack.c.b16 %v2248, %v2246
    %v2315 = vpack.c.b16 %v2249, %v2247
    %v2316 = vpack.c.b16 %v2252, %v2250
    %v2317 = vpack.c.b16 %v2253, %v2251
    %2382 = vmatprep.subr.bf16.mxu0 %v2269
    %2383 = vmatpush1.bf16.msra.mxu0 %v2268
    %2384 = vmatprep.subr.bf16.mxu0 %v2267
    %2385 = vmatpush1.bf16.msra.mxu0 %v2266
    %2386 = vmatprep.subr.bf16.mxu0 %v2265
    %2387 = vmatpush1.bf16.msra.mxu0 %v2264
    %2388 = vmatprep.subr.bf16.mxu0 %v2263
    %2389 = vmatpush1.bf16.msra.mxu0 %v2262
    %2390 = vmatprep.subr.bf16.mxu0 %v2261
    %2391 = vmatpush1.bf16.msra.mxu0 %v2260
    %2392 = vmatprep.subr.bf16.mxu0 %v2259
    %2393 = vmatpush1.bf16.msra.mxu0 %v2258
    %2394 = vmatprep.subr.bf16.mxu0 %v2257
    %2395 = vmatpush1.bf16.msra.mxu0 %v2256
    %2396 = vmatprep.subr.bf16.mxu0 %v2255
    %2397 = vmatpush1.bf16.msra.mxu0 %v2254
    %2398 = vmatprep.subr.bf16.mxu0 %v2285
    %2399 = vmatpush2.bf16.msra.mxu0 %v2284
    %2400 = vmatprep.subr.bf16.mxu0 %v2283
    %2401 = vmatpush2.bf16.msra.mxu0 %v2282
    %2402 = vmatprep.subr.bf16.mxu0 %v2281
    %2403 = vmatpush2.bf16.msra.mxu0 %v2280
    %2404 = vmatprep.subr.bf16.mxu0 %v2279
    %2405 = vmatpush2.bf16.msra.mxu0 %v2278
    %2406 = vmatprep.subr.bf16.mxu0 %v2277
    %2407 = vmatpush2.bf16.msra.mxu0 %v2276
    %2408 = vmatprep.subr.bf16.mxu0 %v2275
    %2409 = vmatpush2.bf16.msra.mxu0 %v2274
    %2410 = vmatprep.subr.bf16.mxu0 %v2273
    %2411 = vmatpush2.bf16.msra.mxu0 %v2272
    %2412 = vmatprep.subr.bf16.mxu0 %v2271
    %2413 = vmatpush2.bf16.msra.mxu0 %v2270
    %2414 = vmatprep.mubr.bf16.mxu0 %v1983
    %2415 = vmatmul.mubr.bf16.gmra.mxu0 %v1982
    %v2416 = vpop.f32.mrf.mxu0
    %v2417 = vadd.f32 %v2055, %v2416
    %v2418 = vpop.f32.mrf.mxu0
    %v2419 = vadd.f32 %v2059, %v2418
    %v2420 = vpop.f32.mrf.mxu0
    %v2421 = vpop.f32.mrf.mxu0
    %2422 = vdwg.mxu0
    %2423 = vmatprep.subr.bf16.mxu0 %v2301
    %2424 = vmatpush1.bf16.msra.mxu0 %v2300
    %2425 = vmatprep.subr.bf16.mxu0 %v2299
    %2426 = vmatpush1.bf16.msra.mxu0 %v2298
    %2427 = vmatprep.subr.bf16.mxu0 %v2297
    %2428 = vmatpush1.bf16.msra.mxu0 %v2296
    %2429 = vmatprep.subr.bf16.mxu0 %v2295
    %2430 = vmatpush1.bf16.msra.mxu0 %v2294
    %2431 = vmatprep.subr.bf16.mxu0 %v2293
    %2432 = vmatpush1.bf16.msra.mxu0 %v2292
    %2433 = vmatprep.subr.bf16.mxu0 %v2291
    %2434 = vmatpush1.bf16.msra.mxu0 %v2290
    %2435 = vmatprep.subr.bf16.mxu0 %v2289
    %2436 = vmatpush1.bf16.msra.mxu0 %v2288
    %2437 = vmatprep.subr.bf16.mxu0 %v2287
    %2438 = vmatpush1.bf16.msra.mxu0 %v2286
    %2439 = vmatprep.subr.bf16.mxu0 %v2317
    %2440 = vmatpush2.bf16.msra.mxu0 %v2316
    %2441 = vmatprep.subr.bf16.mxu0 %v2315
    %2442 = vmatpush2.bf16.msra.mxu0 %v2314
    %2443 = vmatprep.subr.bf16.mxu0 %v2313
    %2444 = vmatpush2.bf16.msra.mxu0 %v2312
    %2445 = vmatprep.subr.bf16.mxu0 %v2311
    %2446 = vmatpush2.bf16.msra.mxu0 %v2310
    %2447 = vmatprep.subr.bf16.mxu0 %v2309
    %2448 = vmatpush2.bf16.msra.mxu0 %v2308
    %2449 = vmatprep.subr.bf16.mxu0 %v2307
    %2450 = vmatpush2.bf16.msra.mxu0 %v2306
    %2451 = vmatprep.subr.bf16.mxu0 %v2305
    %2452 = vmatpush2.bf16.msra.mxu0 %v2304
    %2453 = vmatprep.subr.bf16.mxu0 %v2303
    %2454 = vmatpush2.bf16.msra.mxu0 %v2302
    %2455 = vmatprep.mubr.bf16.mxu0 %v1985
    %2456 = vmatmul.mubr.bf16.gmra.mxu0 %v1984
    %v2457 = vpop.f32.mrf.mxu0
    %v2458 = vadd.f32 %v2417, %v2457
    %v2459 = vpop.f32.mrf.mxu0
    %v2460 = vadd.f32 %v2419, %v2459
    %v2461 = vpop.f32.mrf.mxu0
    %v2462 = vpop.f32.mrf.mxu0
    %2463 = vdwg.mxu0
    %v2464 = vmax.f32 %v2458, 0.0
    %v2465 = vmax.f32 %v2460, 0.0
    %v2466 = vpack.c.bf16 %v2464, %v2464
    %v2467 = vpack.c.bf16 %v2465, %v2465
    %v2468 = vld [vmem:[#allocation6] sm:$0xf]
    %v2469 = vld [vmem:[#allocation6 + $0x4] sm:$0xf]
    %v2470 = vld [vmem:[#allocation6 + $0x8] sm:$0xf]
    %v2471 = vld [vmem:[#allocation6 + $0xc] sm:$0xf]
    %v2472 = vld [vmem:[#allocation6 + $0x10] sm:$0xf]
    %v2473 = vld [vmem:[#allocation6 + $0x14] sm:$0xf]
    %v2474 = vld [vmem:[#allocation6 + $0x18] sm:$0xf]
    %v2475 = vld [vmem:[#allocation6 + $0x1c] sm:$0xf]
    %v2476 = vld [vmem:[#allocation6 + $0x20] sm:$0xf]
    %v2477 = vld [vmem:[#allocation6 + $0x24] sm:$0xf]
    %v2478 = vld [vmem:[#allocation6 + $0x28] sm:$0xf]
    %v2479 = vld [vmem:[#allocation6 + $0x2c] sm:$0xf]
    %v2480 = vld [vmem:[#allocation6 + $0x30] sm:$0xf]
    %v2481 = vld [vmem:[#allocation6 + $0x34] sm:$0xf]
    %v2482 = vld [vmem:[#allocation6 + $0x38] sm:$0xf]
    %v2483 = vld [vmem:[#allocation6 + $0x3c] sm:$0xf]
    %v2484 = vld [vmem:[#allocation6 + $0x40] sm:$0xf]
    %v2485 = vld [vmem:[#allocation6 + $0x44] sm:$0xf]
    %v2486 = vld [vmem:[#allocation6 + $0x48] sm:$0xf]
    %v2487 = vld [vmem:[#allocation6 + $0x4c] sm:$0xf]
    %v2488 = vld [vmem:[#allocation6 + $0x50] sm:$0xf]
    %v2489 = vld [vmem:[#allocation6 + $0x54] sm:$0xf]
    %v2490 = vld [vmem:[#allocation6 + $0x58] sm:$0xf]
    %v2491 = vld [vmem:[#allocation6 + $0x5c] sm:$0xf]
    %v2492 = vld [vmem:[#allocation6 + $0x60] sm:$0xf]
    %v2493 = vld [vmem:[#allocation6 + $0x64] sm:$0xf]
    %v2494 = vld [vmem:[#allocation6 + $0x68] sm:$0xf]
    %v2495 = vld [vmem:[#allocation6 + $0x6c] sm:$0xf]
    %v2496 = vld [vmem:[#allocation6 + $0x70] sm:$0xf]
    %v2497 = vld [vmem:[#allocation6 + $0x74] sm:$0xf]
    %v2498 = vld [vmem:[#allocation6 + $0x78] sm:$0xf]
    %v2499 = vld [vmem:[#allocation6 + $0x7c] sm:$0xf]
    %v2500 = vld [vmem:[%s6] sm:$0x1]
    %v2502 = vlaneseq
    %v2503 = vshrl.u32 %v2502, 7
    %v2504 = vsub.s32 0, %v2503
    %v2505 = vrot.slane %v2500, %v2504
    %v2539 = vunpack.c.l.b16 %v2468
    %v2540 = vunpack.c.l.b16 %v2469
    %v2541 = vunpack.c.l.b16 %v2470
    %v2542 = vunpack.c.l.b16 %v2471
    %v2543 = vunpack.c.l.b16 %v2472
    %v2544 = vunpack.c.l.b16 %v2473
    %v2545 = vunpack.c.l.b16 %v2474
    %v2546 = vunpack.c.l.b16 %v2475
    %v2547 = vunpack.c.l.b16 %v2476
    %v2548 = vunpack.c.l.b16 %v2477
    %v2549 = vunpack.c.l.b16 %v2478
    %v2550 = vunpack.c.l.b16 %v2479
    %v2551 = vunpack.c.l.b16 %v2480
    %v2552 = vunpack.c.l.b16 %v2481
    %v2553 = vunpack.c.l.b16 %v2482
    %v2554 = vunpack.c.l.b16 %v2483
    %v2555 = vunpack.c.l.b16 %v2484
    %v2556 = vunpack.c.l.b16 %v2485
    %v2557 = vunpack.c.l.b16 %v2486
    %v2558 = vunpack.c.l.b16 %v2487
    %v2559 = vunpack.c.l.b16 %v2488
    %v2560 = vunpack.c.l.b16 %v2489
    %v2561 = vunpack.c.l.b16 %v2490
    %v2562 = vunpack.c.l.b16 %v2491
    %v2563 = vunpack.c.l.b16 %v2492
    %v2564 = vunpack.c.l.b16 %v2493
    %v2565 = vunpack.c.l.b16 %v2494
    %v2566 = vunpack.c.l.b16 %v2495
    %v2567 = vunpack.c.l.b16 %v2496
    %v2568 = vunpack.c.l.b16 %v2497
    %v2569 = vunpack.c.l.b16 %v2498
    %v2570 = vunpack.c.l.b16 %v2499
    %v2571 = vpack.c.b16 %v2540, %v2539
    %v2572 = vpack.c.b16 %v2542, %v2541
    %v2573 = vpack.c.b16 %v2544, %v2543
    %v2574 = vpack.c.b16 %v2546, %v2545
    %v2575 = vpack.c.b16 %v2548, %v2547
    %v2576 = vpack.c.b16 %v2550, %v2549
    %v2577 = vpack.c.b16 %v2552, %v2551
    %v2578 = vpack.c.b16 %v2554, %v2553
    %v2579 = vpack.c.b16 %v2556, %v2555
    %v2580 = vpack.c.b16 %v2558, %v2557
    %v2581 = vpack.c.b16 %v2560, %v2559
    %v2582 = vpack.c.b16 %v2562, %v2561
    %v2583 = vpack.c.b16 %v2564, %v2563
    %v2584 = vpack.c.b16 %v2566, %v2565
    %v2585 = vpack.c.b16 %v2568, %v2567
    %v2586 = vpack.c.b16 %v2570, %v2569
    %2603 = vmatprep.subr.bf16.mxu0 0
    %2604 = vmatpush1.bf16.msra.mxu0 %v2578
    %2605 = vmatprep.subr.bf16.mxu0 0
    %2606 = vmatpush1.bf16.msra.mxu0 %v2577
    %2607 = vmatprep.subr.bf16.mxu0 0
    %2608 = vmatpush1.bf16.msra.mxu0 %v2576
    %2609 = vmatprep.subr.bf16.mxu0 0
    %2610 = vmatpush1.bf16.msra.mxu0 %v2575
    %2611 = vmatprep.subr.bf16.mxu0 0
    %2612 = vmatpush1.bf16.msra.mxu0 %v2574
    %2613 = vmatprep.subr.bf16.mxu0 0
    %2614 = vmatpush1.bf16.msra.mxu0 %v2573
    %2615 = vmatprep.subr.bf16.mxu0 0
    %2616 = vmatpush1.bf16.msra.mxu0 %v2572
    %2617 = vmatprep.subr.bf16.mxu0 0
    %2618 = vmatpush1.bf16.msra.mxu0 %v2571
    %2619 = vmatprep.subr.bf16.mxu0 0
    %2620 = vmatpush2.bf16.msra.mxu0 %v2586
    %2621 = vmatprep.subr.bf16.mxu0 0
    %2622 = vmatpush2.bf16.msra.mxu0 %v2585
    %2623 = vmatprep.subr.bf16.mxu0 0
    %2624 = vmatpush2.bf16.msra.mxu0 %v2584
    %2625 = vmatprep.subr.bf16.mxu0 0
    %2626 = vmatpush2.bf16.msra.mxu0 %v2583
    %2627 = vmatprep.subr.bf16.mxu0 0
    %2628 = vmatpush2.bf16.msra.mxu0 %v2582
    %2629 = vmatprep.subr.bf16.mxu0 0
    %2630 = vmatpush2.bf16.msra.mxu0 %v2581
    %2631 = vmatprep.subr.bf16.mxu0 0
    %2632 = vmatpush2.bf16.msra.mxu0 %v2580
    %2633 = vmatprep.subr.bf16.mxu0 0
    %2634 = vmatpush2.bf16.msra.mxu0 %v2579
    %2635 = vmatprep.mubr.bf16.mxu0 %v2467
    %2636 = vmatmul.mubr.bf16.gmra.mxu0 %v2466
    %v2637 = vpop.f32.mrf.mxu0
    %v2638 = vadd.f32 %v2505, %v2637
    %v2639 = vpop.f32.mrf.mxu0
    %v2640 = vpop.f32.mrf.mxu0
    %v2641 = vpop.f32.mrf.mxu0
    %2642 = vdwg.mxu0
    %2643 = vst [vmem:[%s7] sm:$0xff] %v2638
    // Predicated region
    $region42: #{net_forward.1} parent=1 // pred_check
      _
    $region43: #{net_forward.1} parent=1 // pred_check_branch
      %2645 = sbr.rel (0) target = $region45
    $region44: #{net_forward.1} parent=1 // pred_region
      _
    $region45: #{net_forward.1} parent=1 // pred_fallthru
      _
    // Predicated region
    $region46: #{net_forward.1} parent=1 // pred_check
      _
    $region47: #{net_forward.1} parent=1 // pred_check_branch
      %2647 = sbr.rel (0) target = $region49
    $region48: #{net_forward.1} parent=1 // pred_region
      _
    $region49: #{net_forward.1} parent=1 // pred_fallthru
      _
    %2648 = vsyncpa [#allocation3], 1
    %2649 = vsyncpa [#allocation5], 1

</llo_original>
